<compile_context>
chip_gen: v5e
topology: v5e:2x2
jax: 0.10.0
libtpu: 0.0.40
codegen_flags: <defaults>
</compile_context>

<pallas_src>
import jax
import jax.numpy as jnp
from jax import lax
from jax.experimental import pallas as pl
from jax.experimental.pallas import tpu as pltpu

SIGMA_DATA = 0.5
NOISE_MEAN = -1.2
NOISE_STD = 1.2


def _denoiser_kernel(x_ref, noise_ref, sig_ref,            # tiled activations
                     w1_ref, b1_ref, ws_ref, w2_ref, b2_ref,  # resident weights
                     out_ref):
    x = x_ref[...].astype(jnp.float32)          # (TILE_B, D)
    noise = noise_ref[...].astype(jnp.float32)  # (TILE_B, D)
    sig = sig_ref[...]                          # (TILE_B, 2) f32
    sig_n = sig[:, 0:1]                         # noising sigma (freshly sampled)
    sig_s = sig[:, 1:2]                         # scaling sigma (override or same)

    # x_noisy = x + sigma_sampled * noise
    x_noisy = x + sig_n * noise

    # Karras scalings (get_scaling), all f32, rsqrt reused (no divide).
    c_common = sig_s * sig_s + SIGMA_DATA * SIGMA_DATA
    inv_sqrt = lax.rsqrt(c_common)
    c_skip = (SIGMA_DATA * SIGMA_DATA) * inv_sqrt * inv_sqrt
    c_out = (SIGMA_DATA * sig_s) * inv_sqrt
    c_in = inv_sqrt
    c_noise = jnp.log(sig_s) * 0.25

    # Inner model: sigma-conditioned 2-layer MLP on c_in * x_noisy.
    # Matmuls in bf16 on the MXU, f32 accumulation; elementwise stays f32.
    x_scaled = (c_in * x_noisy).astype(jnp.bfloat16)
    h = jnp.dot(x_scaled, w1_ref[...], preferred_element_type=jnp.float32)
    h = jnp.maximum(h + (b1_ref[...] + c_noise * ws_ref[...]), 0.0)
    x_pred = jnp.dot(h.astype(jnp.bfloat16), w2_ref[...],
                     preferred_element_type=jnp.float32)
    x_pred = x_pred + b2_ref[...]

    # x_denoised = c_skip * x_noisy + c_out * x_pred
    out_ref[...] = (c_skip * x_noisy + c_out * x_pred).astype(out_ref.dtype)


def _pick_tile(b, tile_b):
    """Largest batch tile <= tile_b that avoids padding x when possible."""
    if b <= tile_b:
        return b, 0                      # single full-height tile, no pad
    cap = tile_b - (tile_b % 8)
    for cand in range(cap, 7, -8):       # multiple-of-8 divisor of B -> no pad
        if b % cand == 0:
            return cand, 0
    tb = max(cap, 8)                     # fallback: pad (rare)
    bp = ((b + tb - 1) // tb) * tb
    return tb, bp - b


def denoiser_forward(x, params, key, sigma=None, tile_b=512):
    """Pallas implementation of Denoiser.forward.

    x      : (B, D) array (any float dtype; kept native through HBM)
    params : dict of inner-model weights (w1, b1, ws, w2, b2); w1/w2 in bf16
    key    : PRNG key (stands in for torch's global RNG)
    sigma  : optional (B,) override sigmas used for the Karras scalings
             (noising always uses the freshly sampled sigmas, like PyTorch)

    Returns (x_denoised, sigmas) exactly like the PyTorch module
    (sigmas is the override when provided, else the sampled ones).
    """
    b, d = x.shape
    hdim = params["w1"].shape[1]
    x_dtype = x.dtype

    k_sig, k_noise = jax.random.split(key)

    # NoiseDistribution: exp(Normal(mean=-1.2, std=1.2)), shape (B,)
    sigmas = jnp.exp(NOISE_MEAN + NOISE_STD *
                     jax.random.normal(k_sig, (b,), jnp.float32))
    sigmas_used = (jnp.asarray(sigma, jnp.float32).reshape(b)
                   if sigma is not None else sigmas)

    # torch.randn_like(x) equivalent, generated once in the wrapper.
    noise = jax.random.normal(k_noise, (b, d), x_dtype)

    tb, pad = _pick_tile(b, tile_b)
    bp = b + pad

    # One (B, 2) column pair: [:, 0] = noising sigma, [:, 1] = scaling sigma.
    sig2 = jnp.stack([sigmas, sigmas_used], axis=1).astype(jnp.float32)

    x_in, noise_in = x, noise
    if pad:  # only when B has no multiple-of-8 divisor <= tile_b
        x_in = jnp.pad(x_in, ((0, pad), (0, 0)))
        noise_in = jnp.pad(noise_in, ((0, pad), (0, 0)))
        sig2 = jnp.pad(sig2, ((0, pad), (0, 0)), constant_values=1.0)

    grid = (bp // tb,)

    # Constant-index weights: single-buffered (no pointless double-buffer DMA).
    resident = dict(pipeline_mode=pl.Buffered(1))
    in_specs = [
        pl.BlockSpec((tb, d), lambda i: (i, 0)),                 # x tile
        pl.BlockSpec((tb, d), lambda i: (i, 0)),                 # noise tile
        pl.BlockSpec((tb, 2), lambda i: (i, 0)),                 # sigma columns
        pl.BlockSpec((d, hdim), lambda i: (0, 0), **resident),   # w1 (resident)
        pl.BlockSpec((1, hdim), lambda i: (0, 0), **resident),   # b1
        pl.BlockSpec((1, hdim), lambda i: (0, 0), **resident),   # ws
        pl.BlockSpec((hdim, d), lambda i: (0, 0), **resident),   # w2 (resident)
        pl.BlockSpec((1, d), lambda i: (0, 0), **resident),      # b2
    ]
    out_specs = pl.BlockSpec((tb, d), lambda i: (i, 0))

    # VMEM budget derived from the actual tiles; capped so it also fits v7x
    # (64 MiB physical).  v5e/v6e (128 MiB) could go higher but don't need to
    # at these sizes.
    isz = jnp.dtype(x_dtype).itemsize
    req = (2 * tb * d * isz            # x tiles (double buffered)
           + 2 * tb * d * isz          # noise tiles
           + 2 * tb * 2 * 4            # sigma columns
           + 2 * tb * d * isz          # out tiles
           + 4 * d * hdim              # bf16 weights (single buffered)
           + (2 * hdim + d) * 4        # biases / conditioning
           + 4 * tb * hdim             # hidden activation
           + 12 * tb * d)              # f32 intermediates headroom
    vmem_limit = int(min(max(2 * req, 32 * 1024 * 1024), 56 * 1024 * 1024))

    flops = 4 * bp * d * hdim                       # two matmuls (D->H, H->D)
    bytes_accessed = (3 * bp * d * isz              # x + noise in, out
                      + bp * 2 * 4                  # sigma columns
                      + 4 * d * hdim                # bf16 weights
                      + (2 * hdim + d) * 4)         # biases / conditioning
    cost = pl.CostEstimate(flops=flops,
                           transcendentals=2 * bp,
                           bytes_accessed=bytes_accessed)

    out = pl.pallas_call(
        _denoiser_kernel,
        out_shape=jax.ShapeDtypeStruct((bp, d), x_dtype),
        grid=grid,
        in_specs=in_specs,
        out_specs=out_specs,
        compiler_params=pltpu.CompilerParams(
            dimension_semantics=("parallel",),
            vmem_limit_bytes=vmem_limit,
        ),
        cost_estimate=cost,
    )(x_in, noise_in, sig2,
      params["w1"], params["b1"], params["ws"], params["w2"], params["b2"])

    if pad:
        out = out[:b]
    return out, sigmas_used


def init_params(key, d, h):
    k1, k2, k3 = jax.random.split(key, 3)
    return {
        # weights stored bf16 (MXU path); biases / conditioning stay f32
        "w1": (jax.random.normal(k1, (d, h), jnp.float32)
               * (1.0 / jnp.sqrt(d))).astype(jnp.bfloat16),
        "b1": jnp.zeros((1, h), jnp.float32),
        "ws": jax.random.normal(k3, (1, h), jnp.float32) * 0.1,
        "w2": (jax.random.normal(k2, (h, d), jnp.float32)
               * (1.0 / jnp.sqrt(h))).astype(jnp.bfloat16),
        "b2": jnp.zeros((1, d), jnp.float32),
    }


def _reference(x, noise, params, sig_sample, sig_scale):
    """Pure-JAX mirror of the PyTorch Denoiser.forward (same bf16 casts)."""
    x = x.astype(jnp.float32)
    noise = noise.astype(jnp.float32)
    sig_n = sig_sample[:, None]
    sig_s = sig_scale[:, None]
    x_noisy = x + sig_n * noise
    c_common = sig_s ** 2 + SIGMA_DATA ** 2
    c_skip = SIGMA_DATA ** 2 / c_common
    c_out = sig_s * SIGMA_DATA / jnp.sqrt(c_common)
    c_in = 1.0 / jnp.sqrt(c_common)
    c_noise = jnp.log(sig_s) * 0.25
    xs = (c_in * x_noisy).astype(jnp.bfloat16)
    h = jnp.maximum(
        jnp.dot(xs, params["w1"], preferred_element_type=jnp.float32)
        + params["b1"] + c_noise * params["ws"], 0.0)
    x_pred = jnp.dot(h.astype(jnp.bfloat16), params["w2"],
                     preferred_element_type=jnp.float32) + params["b2"]
    return c_skip * x_noisy + c_out * x_pred


if __name__ == "__main__":
    # Two 128-row tiles -> exercises the batch grid, weight residency and a
    # full lane-dense MXU pass, while staying small.
    B, D, H = 256, 128, 128
    key = jax.random.PRNGKey(0)
    k_param, k_x, k_fwd = jax.random.split(key, 3)

    params = init_params(k_param, D, H)
    x = jax.random.normal(k_x, (B, D), jnp.float32)

    x_denoised, sigmas = denoiser_forward(x, params, k_fwd, tile_b=128)
    jax.block_until_ready(x_denoised)
    jax.block_until_ready(sigmas)

    # Rebuild the same sigmas / noise the wrapper drew and check vs pure JAX.
    k_sig, k_noise = jax.random.split(k_fwd)
    sig_sample = jnp.exp(NOISE_MEAN + NOISE_STD *
                         jax.random.normal(k_sig, (B,), jnp.float32))
    noise = jax.random.normal(k_noise, (B, D), jnp.float32)
    ref = _reference(x, noise, params, sig_sample, sig_sample)

    assert x_denoised.shape == (B, D) and sigmas.shape == (B,)
    assert bool(jnp.all(jnp.isfinite(x_denoised)))
    assert bool(jnp.all(sigmas > 0))
    assert bool(jnp.allclose(x_denoised.astype(jnp.float32), ref,
                             rtol=5e-2, atol=5e-2))
    print("KERNEL_OK")
</pallas_src>

<mosaic_0001>
module attributes {stable_mosaic.version = 11 : i64} {
  func.func @_denoiser_kernel(%arg0: i32, %arg1: memref<128x128xf32, #tpu.memory_space<vmem>>, %arg2: memref<128x128xf32, #tpu.memory_space<vmem>>, %arg3: memref<128x2xf32, #tpu.memory_space<vmem>>, %arg4: memref<128x128xbf16, #tpu.memory_space<vmem>>, %arg5: memref<1x128xf32, #tpu.memory_space<vmem>>, %arg6: memref<1x128xf32, #tpu.memory_space<vmem>>, %arg7: memref<128x128xbf16, #tpu.memory_space<vmem>>, %arg8: memref<1x128xf32, #tpu.memory_space<vmem>>, %arg9: memref<128x128xf32, #tpu.memory_space<vmem>>) attributes {dimension_semantics = [#tpu.dimension_semantics<parallel>], iteration_bounds = array<i64: 2>, scalar_prefetch = 0 : i64, scratch_operands = 0 : i64, tpu.core_type = #tpu.core_type<tc>, window_params = [{transform_indices = @transform_0, window_bounds = array<i64: 128, 128>}, {transform_indices = @transform_1, window_bounds = array<i64: 128, 128>}, {transform_indices = @transform_2, window_bounds = array<i64: 128, 2>}, {pipeline_mode = #tpu.pipeline_mode<synchronous>, transform_indices = @transform_3, window_bounds = array<i64: 128, 128>}, {pipeline_mode = #tpu.pipeline_mode<synchronous>, transform_indices = @transform_4, window_bounds = array<i64: 1, 128>}, {pipeline_mode = #tpu.pipeline_mode<synchronous>, transform_indices = @transform_5, window_bounds = array<i64: 1, 128>}, {pipeline_mode = #tpu.pipeline_mode<synchronous>, transform_indices = @transform_6, window_bounds = array<i64: 128, 128>}, {pipeline_mode = #tpu.pipeline_mode<synchronous>, transform_indices = @transform_7, window_bounds = array<i64: 1, 128>}, {transform_indices = @transform_8, window_bounds = array<i64: 128, 128>}]} {
    %c0 = arith.constant 0 : index
    %c0_0 = arith.constant 0 : index
    %0 = vector.load %arg1[%c0, %c0_0] : memref<128x128xf32, #tpu.memory_space<vmem>>, vector<128x128xf32>
    %c0_1 = arith.constant 0 : index
    %c0_2 = arith.constant 0 : index
    %1 = vector.load %arg2[%c0_1, %c0_2] : memref<128x128xf32, #tpu.memory_space<vmem>>, vector<128x128xf32>
    %c0_3 = arith.constant 0 : index
    %c0_4 = arith.constant 0 : index
    %2 = vector.load %arg3[%c0_3, %c0_4] : memref<128x2xf32, #tpu.memory_space<vmem>>, vector<128x2xf32>
    %3 = vector.extract_strided_slice %2 {offsets = [0, 0], sizes = [128, 1], strides = [1, 1]} : vector<128x2xf32> to vector<128x1xf32>
    %4 = vector.extract_strided_slice %2 {offsets = [0, 1], sizes = [128, 1], strides = [1, 1]} : vector<128x2xf32> to vector<128x1xf32>
    %5 = vector.broadcast %3 : vector<128x1xf32> to vector<128x128xf32>
    %6 = arith.mulf %5, %1 : vector<128x128xf32>
    %7 = arith.addf %0, %6 : vector<128x128xf32>
    %8 = arith.mulf %4, %4 : vector<128x1xf32>
    %cst = arith.constant 2.500000e-01 : f32
    %9 = vector.broadcast %cst : f32 to vector<128x1xf32>
    %10 = arith.addf %8, %9 : vector<128x1xf32>
    %11 = math.rsqrt %10 : vector<128x1xf32>
    %cst_5 = arith.constant 2.500000e-01 : f32
    %12 = vector.broadcast %cst_5 : f32 to vector<128x1xf32>
    %13 = arith.mulf %12, %11 : vector<128x1xf32>
    %14 = arith.mulf %13, %11 : vector<128x1xf32>
    %cst_6 = arith.constant 5.000000e-01 : f32
    %15 = vector.broadcast %cst_6 : f32 to vector<128x1xf32>
    %16 = arith.mulf %15, %4 : vector<128x1xf32>
    %17 = arith.mulf %16, %11 : vector<128x1xf32>
    %18 = math.log %4 : vector<128x1xf32>
    %cst_7 = arith.constant 2.500000e-01 : f32
    %19 = vector.broadcast %cst_7 : f32 to vector<128x1xf32>
    %20 = arith.mulf %18, %19 : vector<128x1xf32>
    %21 = vector.broadcast %11 : vector<128x1xf32> to vector<128x128xf32>
    %22 = arith.mulf %21, %7 : vector<128x128xf32>
    %23 = arith.truncf %22 : vector<128x128xf32> to vector<128x128xbf16>
    %c0_8 = arith.constant 0 : index
    %c0_9 = arith.constant 0 : index
    %24 = vector.load %arg4[%c0_8, %c0_9] : memref<128x128xbf16, #tpu.memory_space<vmem>>, vector<128x128xbf16>
    %cst_10 = arith.constant dense<0.000000e+00> : vector<128x128xf32>
    %25 = tpu.matmul %23, %24, %cst_10 {dimension_numbers = #tpu.dot_dimension_numbers<[1], [0], [0], [1], [0, 0, 1, 1], [], []>} : vector<128x128xbf16>, vector<128x128xbf16>, vector<128x128xf32> -> vector<128x128xf32>
    %c0_11 = arith.constant 0 : index
    %c0_12 = arith.constant 0 : index
    %26 = vector.load %arg5[%c0_11, %c0_12] : memref<1x128xf32, #tpu.memory_space<vmem>>, vector<1x128xf32>
    %c0_13 = arith.constant 0 : index
    %c0_14 = arith.constant 0 : index
    %27 = vector.load %arg6[%c0_13, %c0_14] : memref<1x128xf32, #tpu.memory_space<vmem>>, vector<1x128xf32>
    %28 = vector.broadcast %20 : vector<128x1xf32> to vector<128x128xf32>
    %29 = vector.broadcast %27 : vector<1x128xf32> to vector<128x128xf32>
    %30 = arith.mulf %28, %29 : vector<128x128xf32>
    %31 = vector.broadcast %26 : vector<1x128xf32> to vector<128x128xf32>
    %32 = arith.addf %31, %30 : vector<128x128xf32>
    %33 = arith.addf %25, %32 : vector<128x128xf32>
    %cst_15 = arith.constant 0.000000e+00 : f32
    %34 = vector.broadcast %cst_15 : f32 to vector<128x128xf32>
    %35 = arith.maximumf %33, %34 : vector<128x128xf32>
    %36 = arith.truncf %35 : vector<128x128xf32> to vector<128x128xbf16>
    %c0_16 = arith.constant 0 : index
    %c0_17 = arith.constant 0 : index
    %37 = vector.load %arg7[%c0_16, %c0_17] : memref<128x128xbf16, #tpu.memory_space<vmem>>, vector<128x128xbf16>
    %cst_18 = arith.constant dense<0.000000e+00> : vector<128x128xf32>
    %38 = tpu.matmul %36, %37, %cst_18 {dimension_numbers = #tpu.dot_dimension_numbers<[1], [0], [0], [1], [0, 0, 1, 1], [], []>} : vector<128x128xbf16>, vector<128x128xbf16>, vector<128x128xf32> -> vector<128x128xf32>
    %c0_19 = arith.constant 0 : index
    %c0_20 = arith.constant 0 : index
    %39 = vector.load %arg8[%c0_19, %c0_20] : memref<1x128xf32, #tpu.memory_space<vmem>>, vector<1x128xf32>
    %40 = vector.broadcast %39 : vector<1x128xf32> to vector<128x128xf32>
    %41 = arith.addf %38, %40 : vector<128x128xf32>
    %42 = vector.broadcast %14 : vector<128x1xf32> to vector<128x128xf32>
    %43 = arith.mulf %42, %7 : vector<128x128xf32>
    %44 = vector.broadcast %17 : vector<128x1xf32> to vector<128x128xf32>
    %45 = arith.mulf %44, %41 : vector<128x128xf32>
    %46 = arith.addf %43, %45 : vector<128x128xf32>
    %c0_21 = arith.constant 0 : index
    %c0_22 = arith.constant 0 : index
    %47 = vector.load %arg9[%c0_21, %c0_22] : memref<128x128xf32, #tpu.memory_space<vmem>>, vector<128x128xf32>
    tpu.vector_store %arg9[%c0_21, %c0_22], %46 {strides = array<i32>} : memref<128x128xf32, #tpu.memory_space<vmem>>, vector<128x128xf32>,
    return
  }
  func.func @transform_0(%arg0: i32) -> (i32, i32) {
    %c0_i32 = arith.constant 0 : i32
    %c0_i32_0 = arith.constant 0 : i32
    return %arg0, %c0_i32 : i32, i32
  }
  func.func @transform_1(%arg0: i32) -> (i32, i32) {
    %c0_i32 = arith.constant 0 : i32
    %c0_i32_0 = arith.constant 0 : i32
    return %arg0, %c0_i32 : i32, i32
  }
  func.func @transform_2(%arg0: i32) -> (i32, i32) {
    %c0_i32 = arith.constant 0 : i32
    %c0_i32_0 = arith.constant 0 : i32
    return %arg0, %c0_i32 : i32, i32
  }
  func.func @transform_3(%arg0: i32) -> (i32, i32) {
    %c0_i32 = arith.constant 0 : i32
    %c0_i32_0 = arith.constant 0 : i32
    %c0_i32_1 = arith.constant 0 : i32
    return %c0_i32, %c0_i32_0 : i32, i32
  }
  func.func @transform_4(%arg0: i32) -> (i32, i32) {
    %c0_i32 = arith.constant 0 : i32
    %c0_i32_0 = arith.constant 0 : i32
    %c0_i32_1 = arith.constant 0 : i32
    return %c0_i32, %c0_i32_0 : i32, i32
  }
  func.func @transform_5(%arg0: i32) -> (i32, i32) {
    %c0_i32 = arith.constant 0 : i32
    %c0_i32_0 = arith.constant 0 : i32
    %c0_i32_1 = arith.constant 0 : i32
    return %c0_i32, %c0_i32_0 : i32, i32
  }
  func.func @transform_6(%arg0: i32) -> (i32, i32) {
    %c0_i32 = arith.constant 0 : i32
    %c0_i32_0 = arith.constant 0 : i32
    %c0_i32_1 = arith.constant 0 : i32
    return %c0_i32, %c0_i32_0 : i32, i32
  }
  func.func @transform_7(%arg0: i32) -> (i32, i32) {
    %c0_i32 = arith.constant 0 : i32
    %c0_i32_0 = arith.constant 0 : i32
    %c0_i32_1 = arith.constant 0 : i32
    return %c0_i32, %c0_i32_0 : i32, i32
  }
  func.func @transform_8(%arg0: i32) -> (i32, i32) {
    %c0_i32 = arith.constant 0 : i32
    %c0_i32_0 = arith.constant 0 : i32
    return %arg0, %c0_i32 : i32, i32
  }
}

</mosaic_0001>

<llo_original>
// kernel: tpu_custom_call.1
$region0: #{tpu_custom_call.1}
  #allocation0 [shape = 'u32[]', space=smem, size = 0x4, offset = 0x4, fixed_abs, tag = 'smem constant byte address 0x4 - core index']
  #allocation1 [shape = 'u32[72,128]{1,0:T(1,128)}', space=vmem, size = 0x9000, scoped, tag = 'internal scratch']
  %s0 = inlined_call_operand.vmem [shape: f32[256,128], index: 0, kind: input, shape index: {}]
  %s1 = inlined_call_operand.hbm [shape: f32[256,128], index: 1, kind: input, shape index: {}]
  %s2 = inlined_call_operand.vmem [shape: f32[256,2], index: 2, kind: input, shape index: {}]
  %s3 = inlined_call_operand.hbm [shape: bf16[128,128], index: 3, kind: input, shape index: {}]
  %s4 = inlined_call_operand.vmem [shape: f32[1,128], index: 4, kind: input, shape index: {}]
  %s5 = inlined_call_operand.vmem [shape: f32[1,128], index: 5, kind: input, shape index: {}]
  %s6 = inlined_call_operand.hbm [shape: bf16[128,128], index: 6, kind: input, shape index: {}]
  %s7 = inlined_call_operand.vmem [shape: f32[1,128], index: 7, kind: input, shape index: {}]
  %s8 = inlined_call_operand.hbm [shape: f32[256,128], index: 8, kind: output, shape index: {}]
  %s9 = sld [smem:[#allocation0]]
  $region77: #{tpu_custom_call.1} parent=0
    _
  %s11 = ssub.s32 1, %s9
  %s12 = scalar_select 0, %s11, %s9
  $region1: #{tpu_custom_call.1} parent=0
    #allocation2 [shape = 'u8[131072]{0}', space=vmem, size = 0x20000, scoped, tag = 'input window, operand 1']
    #allocation3 [shape = 's32[2]{0}', space=sflag, size = 0x8, scoped, tag = 'scoped memory for tpu_custom_call.1']
    #allocation4 [shape = 's32[2]{0}', space=sflag, size = 0x8, scoped, tag = 'scoped memory for tpu_custom_call.1']
    #allocation5 [shape = 'u8[32768]{0}', space=vmem, size = 0x8000, scoped, tag = 'input window, operand 3, single buffered']
    #allocation6 [shape = 's32[1]{0}', space=sflag, size = 0x4, scoped, tag = 'scoped memory for tpu_custom_call.1']
    #allocation7 [shape = 'u8[32768]{0}', space=vmem, size = 0x8000, scoped, tag = 'input window, operand 6, single buffered']
    #allocation8 [shape = 'u8[131072]{0}', space=vmem, size = 0x20000, scoped, tag = 'output window, operand 0']
    %13 = vsyncpa [#allocation3], 0
    %s14 = scalar_lea.sflag [#allocation3], 1
    %15 = vsyncpa %s14, 0
    %16 = vsyncpa [#allocation6], 0
    %17 = vsyncpa [#allocation4], 0
    %s18 = scalar_lea.sflag [#allocation4], 1
    %19 = vsyncpa %s18, 0
    loop: start=0, step=1, limit=4
    $region2: #{tpu_custom_call.1} parent=1 // loop_pre_header
      _
    $region3: #{tpu_custom_call.1} parent=1 // loop_header
      %s21 = sphi 0, %s25
      %p22 = scmp.ge.s32.totalorder %s21, 4
      %s31 = sphi 0, %s33
      %s34 = sphi 0, %s31
      %s35 = sphi 0, %s34
      %s51 = sphi 0, %s35
      %s57 = sphi 0, %s59
      %s60 = sphi 0, %s57
      %s61 = sphi 0, %s60
      %s77 = sphi 0, %s61
      %s83 = sphi 0, %s85
      %s86 = sphi 0, %s83
      %s87 = sphi 0, %s86
      %s103 = sphi 0, %s87
      %s107 = sphi 0, %s107
      %s109 = sphi 0, %s107
      %s110 = sphi 0, %s109
      %s124 = sphi 0, %s110
      %s128 = sphi 0, %s128
      %s130 = sphi 0, %s128
      %s131 = sphi 0, %s130
      %s145 = sphi 0, %s131
      %s149 = sphi 0, %s149
      %s151 = sphi 0, %s149
      %s152 = sphi 0, %s151
      %s166 = sphi 0, %s152
      %s170 = sphi 0, %s170
      %s172 = sphi 0, %s170
      %s173 = sphi 0, %s172
      %s187 = sphi 0, %s173
      %s191 = sphi 0, %s191
      %s193 = sphi 0, %s191
      %s194 = sphi 0, %s193
      %s208 = sphi 0, %s194
      %s214 = sphi 0, %s216
      %s217 = sphi 0, %s214
      %s218 = sphi 0, %s217
      %s234 = sphi 0, %s218
    $region4: #{tpu_custom_call.1} parent=1 // loop_header_branch
      %24 = sbr.rel (%p22) target = $region8
    $region5: #{tpu_custom_call.1} parent=1 // loop_body
      %s26 = ssub.s32 %s21, 1
      %s27 = ssub.s32 %s21, 2
      %s28 = sadd.s32 %s21, 1
      %s29 = ssub.s32 %s21, %s28
      %p30 = scmp.eq.s32.totalorder %s29, 0
      %s32 = sadd.s32 %s31, 1
      %s33 = scalar_select %p30, %s31, %s32
      %p36 = pneg %p30
      %p37 = scmp.eq.s32.totalorder %s21, 1
      %p38 = por %p36, %p37
      %p39 = scmp.ne.s32.totalorder %s31, %s34
      %p40 = scmp.eq.s32.totalorder %s21, 0
      %p41 = por %p39, %p40
      %p42 = scmp.ne.s32.totalorder %s31, %s34
      %p43 = scmp.eq.s32.totalorder %s26, 1
      %p44 = por %p42, %p43
      %p45 = scmp.ne.s32.totalorder %s34, %s35
      %p46 = scmp.eq.s32.totalorder %s26, 0
      %p47 = por %p45, %p46
      %p48 = scmp.ne.s32.totalorder %s34, %s35
      %p49 = scmp.eq.s32.totalorder %s27, 1
      %p50 = por %p48, %p49
      %p52 = scmp.ne.s32.totalorder %s35, %s51
      %p53 = scmp.eq.s32.totalorder %s27, 0
      %p54 = por %p52, %p53
      %s55 = ssub.s32 %s21, %s28
      %p56 = scmp.eq.s32.totalorder %s55, 0
      %s58 = sadd.s32 %s57, 1
      %s59 = scalar_select %p56, %s57, %s58
      %p62 = pneg %p56
      %p63 = scmp.eq.s32.totalorder %s21, 1
      %p64 = por %p62, %p63
      %p65 = scmp.ne.s32.totalorder %s57, %s60
      %p66 = scmp.eq.s32.totalorder %s21, 0
      %p67 = por %p65, %p66
      %p68 = scmp.ne.s32.totalorder %s57, %s60
      %p69 = scmp.eq.s32.totalorder %s26, 1
      %p70 = por %p68, %p69
      %p71 = scmp.ne.s32.totalorder %s60, %s61
      %p72 = scmp.eq.s32.totalorder %s26, 0
      %p73 = por %p71, %p72
      %p74 = scmp.ne.s32.totalorder %s60, %s61
      %p75 = scmp.eq.s32.totalorder %s27, 1
      %p76 = por %p74, %p75
      %p78 = scmp.ne.s32.totalorder %s61, %s77
      %p79 = scmp.eq.s32.totalorder %s27, 0
      %p80 = por %p78, %p79
      %s81 = ssub.s32 %s21, %s28
      %p82 = scmp.eq.s32.totalorder %s81, 0
      %s84 = sadd.s32 %s83, 1
      %s85 = scalar_select %p82, %s83, %s84
      %p88 = pneg %p82
      %p89 = scmp.eq.s32.totalorder %s21, 1
      %p90 = por %p88, %p89
      %p91 = scmp.ne.s32.totalorder %s83, %s86
      %p92 = scmp.eq.s32.totalorder %s21, 0
      %p93 = por %p91, %p92
      %p94 = scmp.ne.s32.totalorder %s83, %s86
      %p95 = scmp.eq.s32.totalorder %s26, 1
      %p96 = por %p94, %p95
      %p97 = scmp.ne.s32.totalorder %s86, %s87
      %p98 = scmp.eq.s32.totalorder %s26, 0
      %p99 = por %p97, %p98
      %p100 = scmp.ne.s32.totalorder %s86, %s87
      %p101 = scmp.eq.s32.totalorder %s27, 1
      %p102 = por %p100, %p101
      %p104 = scmp.ne.s32.totalorder %s87, %s103
      %p105 = scmp.eq.s32.totalorder %s27, 0
      %p106 = por %p104, %p105
      %s108 = sadd.s32 %s107, 1
      %p111 = scmp.eq.s32.totalorder %s21, 1
      %p112 = scmp.ne.s32.totalorder %s107, %s109
      %p113 = scmp.eq.s32.totalorder %s21, 0
      %p114 = por %p112, %p113
      %p115 = scmp.ne.s32.totalorder %s107, %s109
      %p116 = scmp.eq.s32.totalorder %s26, 1
      %p117 = por %p115, %p116
      %p118 = scmp.ne.s32.totalorder %s109, %s110
      %p119 = scmp.eq.s32.totalorder %s26, 0
      %p120 = por %p118, %p119
      %p121 = scmp.ne.s32.totalorder %s109, %s110
      %p122 = scmp.eq.s32.totalorder %s27, 1
      %p123 = por %p121, %p122
      %p125 = scmp.ne.s32.totalorder %s110, %s124
      %p126 = scmp.eq.s32.totalorder %s27, 0
      %p127 = por %p125, %p126
      %s129 = sadd.s32 %s128, 1
      %p132 = scmp.eq.s32.totalorder %s21, 1
      %p133 = scmp.ne.s32.totalorder %s128, %s130
      %p134 = scmp.eq.s32.totalorder %s21, 0
      %p135 = por %p133, %p134
      %p136 = scmp.ne.s32.totalorder %s128, %s130
      %p137 = scmp.eq.s32.totalorder %s26, 1
      %p138 = por %p136, %p137
      %p139 = scmp.ne.s32.totalorder %s130, %s131
      %p140 = scmp.eq.s32.totalorder %s26, 0
      %p141 = por %p139, %p140
      %p142 = scmp.ne.s32.totalorder %s130, %s131
      %p143 = scmp.eq.s32.totalorder %s27, 1
      %p144 = por %p142, %p143
      %p146 = scmp.ne.s32.totalorder %s131, %s145
      %p147 = scmp.eq.s32.totalorder %s27, 0
      %p148 = por %p146, %p147
      %s150 = sadd.s32 %s149, 1
      %p153 = scmp.eq.s32.totalorder %s21, 1
      %p154 = scmp.ne.s32.totalorder %s149, %s151
      %p155 = scmp.eq.s32.totalorder %s21, 0
      %p156 = por %p154, %p155
      %p157 = scmp.ne.s32.totalorder %s149, %s151
      %p158 = scmp.eq.s32.totalorder %s26, 1
      %p159 = por %p157, %p158
      %p160 = scmp.ne.s32.totalorder %s151, %s152
      %p161 = scmp.eq.s32.totalorder %s26, 0
      %p162 = por %p160, %p161
      %p163 = scmp.ne.s32.totalorder %s151, %s152
      %p164 = scmp.eq.s32.totalorder %s27, 1
      %p165 = por %p163, %p164
      %p167 = scmp.ne.s32.totalorder %s152, %s166
      %p168 = scmp.eq.s32.totalorder %s27, 0
      %p169 = por %p167, %p168
      %s171 = sadd.s32 %s170, 1
      %p174 = scmp.eq.s32.totalorder %s21, 1
      %p175 = scmp.ne.s32.totalorder %s170, %s172
      %p176 = scmp.eq.s32.totalorder %s21, 0
      %p177 = por %p175, %p176
      %p178 = scmp.ne.s32.totalorder %s170, %s172
      %p179 = scmp.eq.s32.totalorder %s26, 1
      %p180 = por %p178, %p179
      %p181 = scmp.ne.s32.totalorder %s172, %s173
      %p182 = scmp.eq.s32.totalorder %s26, 0
      %p183 = por %p181, %p182
      %p184 = scmp.ne.s32.totalorder %s172, %s173
      %p185 = scmp.eq.s32.totalorder %s27, 1
      %p186 = por %p184, %p185
      %p188 = scmp.ne.s32.totalorder %s173, %s187
      %p189 = scmp.eq.s32.totalorder %s27, 0
      %p190 = por %p188, %p189
      %s192 = sadd.s32 %s191, 1
      %p195 = scmp.eq.s32.totalorder %s21, 1
      %p196 = scmp.ne.s32.totalorder %s191, %s193
      %p197 = scmp.eq.s32.totalorder %s21, 0
      %p198 = por %p196, %p197
      %p199 = scmp.ne.s32.totalorder %s191, %s193
      %p200 = scmp.eq.s32.totalorder %s26, 1
      %p201 = por %p199, %p200
      %p202 = scmp.ne.s32.totalorder %s193, %s194
      %p203 = scmp.eq.s32.totalorder %s26, 0
      %p204 = por %p202, %p203
      %p205 = scmp.ne.s32.totalorder %s193, %s194
      %p206 = scmp.eq.s32.totalorder %s27, 1
      %p207 = por %p205, %p206
      %p209 = scmp.ne.s32.totalorder %s194, %s208
      %p210 = scmp.eq.s32.totalorder %s27, 0
      %p211 = por %p209, %p210
      %s212 = ssub.s32 %s21, %s28
      %p213 = scmp.eq.s32.totalorder %s212, 0
      %s215 = sadd.s32 %s214, 1
      %s216 = scalar_select %p213, %s214, %s215
      %p219 = pneg %p213
      %p220 = scmp.eq.s32.totalorder %s21, 1
      %p221 = por %p219, %p220
      %p222 = scmp.ne.s32.totalorder %s214, %s217
      %p223 = scmp.eq.s32.totalorder %s21, 0
      %p224 = por %p222, %p223
      %p225 = scmp.ne.s32.totalorder %s214, %s217
      %p226 = scmp.eq.s32.totalorder %s26, 1
      %p227 = por %p225, %p226
      %p228 = scmp.ne.s32.totalorder %s217, %s218
      %p229 = scmp.eq.s32.totalorder %s26, 0
      %p230 = por %p228, %p229
      %p231 = scmp.ne.s32.totalorder %s217, %s218
      %p232 = scmp.eq.s32.totalorder %s27, 1
      %p233 = por %p231, %p232
      %p235 = scmp.ne.s32.totalorder %s218, %s234
      %p236 = scmp.eq.s32.totalorder %s27, 0
      %p237 = por %p235, %p236
      %p238 = scmp.le.s32.totalorder 1, %s21
      %p239 = scmp.lt.s32.totalorder %s21, 3
      %p240 = pnand %p238, %p239
      %p241 = pneg %p240
      // Predicated region
      $region9: #{tpu_custom_call.1} parent=5 // pred_check
        _
      $region10: #{tpu_custom_call.1} parent=5 // pred_check_branch
        %243 = sbr.rel (%p240) target = $region12
      $region11: #{tpu_custom_call.1} parent=5 // pred_region
        %s244 = ssub.s32 %s21, 1
        // Predicated region
        $region13: #{tpu_custom_call.1} parent=11 // pred_check
          %p245 = pneg %p120
        $region14: #{tpu_custom_call.1} parent=11 // pred_check_branch
          %247 = sbr.rel (%p245) target = $region16
        $region15: #{tpu_custom_call.1} parent=11 // pred_region
          %249 = vsyncadd [#allocation6], 0
          %s250 = sshll.u32 %s3, 4
          %s251 = int_to_ptr.hbm [resolvable:$true] %s250
          %s252 = sshll.u32 [#allocation5], 4
          %s253 = int_to_ptr.vmem [resolvable:$true] %s252
          %258 = dma.hbm_to_vmem [thread:$0]  %s251, 1024, %s253, [#allocation6], 64, 64, 4
        $region16: #{tpu_custom_call.1} parent=11 // pred_fallthru
          _
        // Predicated region
        $region17: #{tpu_custom_call.1} parent=11 // pred_check
          %p259 = pneg %p141
        $region18: #{tpu_custom_call.1} parent=11 // pred_check_branch
          %261 = sbr.rel (%p259) target = $region20
        $region19: #{tpu_custom_call.1} parent=11 // pred_region
          _
        $region20: #{tpu_custom_call.1} parent=11 // pred_fallthru
          _
        // Predicated region
        $region21: #{tpu_custom_call.1} parent=11 // pred_check
          %p262 = pneg %p162
        $region22: #{tpu_custom_call.1} parent=11 // pred_check_branch
          %264 = sbr.rel (%p262) target = $region24
        $region23: #{tpu_custom_call.1} parent=11 // pred_region
          _
        $region24: #{tpu_custom_call.1} parent=11 // pred_fallthru
          _
        // Predicated region
        $region25: #{tpu_custom_call.1} parent=11 // pred_check
          %p265 = pneg %p183
        $region26: #{tpu_custom_call.1} parent=11 // pred_check_branch
          %267 = sbr.rel (%p265) target = $region28
        $region27: #{tpu_custom_call.1} parent=11 // pred_region
          %269 = vsyncadd [#allocation6], 0
          %s270 = sshll.u32 %s6, 4
          %s271 = int_to_ptr.hbm [resolvable:$true] %s270
          %s272 = sshll.u32 [#allocation7], 4
          %s273 = int_to_ptr.vmem [resolvable:$true] %s272
          %278 = dma.hbm_to_vmem [thread:$0]  %s271, 1024, %s273, [#allocation6], 64, 64, 4
        $region28: #{tpu_custom_call.1} parent=11 // pred_fallthru
          _
        // Predicated region
        $region29: #{tpu_custom_call.1} parent=11 // pred_check
          %p279 = pneg %p204
        $region30: #{tpu_custom_call.1} parent=11 // pred_check_branch
          %281 = sbr.rel (%p279) target = $region32
        $region31: #{tpu_custom_call.1} parent=11 // pred_region
          _
        $region32: #{tpu_custom_call.1} parent=11 // pred_fallthru
          _
      $region12: #{tpu_custom_call.1} parent=5 // pred_fallthru
        _
      %p282 = scmp.lt.s32.totalorder %s21, 2
      // Predicated region
      $region33: #{tpu_custom_call.1} parent=5 // pred_check
        %p283 = pneg %p282
      $region34: #{tpu_custom_call.1} parent=5 // pred_check_branch
        %285 = sbr.rel (%p283) target = $region36
      $region35: #{tpu_custom_call.1} parent=5 // pred_region
        // Predicated region
        $region37: #{tpu_custom_call.1} parent=35 // pred_check
          %p286 = pneg %p41
        $region38: #{tpu_custom_call.1} parent=35 // pred_check_branch
          %288 = sbr.rel (%p286) target = $region40
        $region39: #{tpu_custom_call.1} parent=35 // pred_region
          %s289 = smul.u32 16, %s21
          %p290 = scmp.lt.s32.totalorder %s289, 31
          %s291 = scalar_select %p290, %s289, 31
          %s292 = smul.addr %s291, 8
          %s293 = scalar_lea.vmem %s0, %s292
          %s294 = smul.u32 16, %s21
        $region40: #{tpu_custom_call.1} parent=35 // pred_fallthru
          _
        // Predicated region
        $region41: #{tpu_custom_call.1} parent=35 // pred_check
          %p295 = pneg %p67
        $region42: #{tpu_custom_call.1} parent=35 // pred_check_branch
          %297 = sbr.rel (%p295) target = $region44
        $region43: #{tpu_custom_call.1} parent=35 // pred_region
          %s298 = sand.u32 %s57, 1
          %s299 = scalar_lea.sflag [#allocation3], %s298
          %s300 = sand.u32 %s57, 1
          %s301 = smul.addr %s300, 128
          %s302 = scalar_lea.vmem [#allocation2], %s301
          %s303 = smul.u32 16, %s21
          %305 = vsyncadd %s299, 0
          %s306 = smul.addr %s303, 8
          %s307 = scalar_lea.hbm %s1, %s306
          %s308 = sshll.u32 %s307, 4
          %s309 = int_to_ptr.hbm [resolvable:$true] %s308
          %s310 = sshll.u32 %s302, 4
          %s311 = int_to_ptr.vmem [resolvable:$true] %s310
          %316 = dma.hbm_to_vmem [thread:$0]  %s309, 2048, %s311, %s299, 128, 128, 8
        $region44: #{tpu_custom_call.1} parent=35 // pred_fallthru
          _
        // Predicated region
        $region45: #{tpu_custom_call.1} parent=35 // pred_check
          %p317 = pneg %p93
        $region46: #{tpu_custom_call.1} parent=35 // pred_check_branch
          %319 = sbr.rel (%p317) target = $region48
        $region47: #{tpu_custom_call.1} parent=35 // pred_region
          %s320 = smul.u32 16, %s21
          %p321 = scmp.lt.s32.totalorder %s320, 31
          %s322 = scalar_select %p321, %s320, 31
          %s323 = smul.addr %s322, 8
          %s324 = scalar_lea.vmem %s2, %s323
          %s325 = smul.u32 16, %s21
        $region48: #{tpu_custom_call.1} parent=35 // pred_fallthru
          _
      $region36: #{tpu_custom_call.1} parent=5 // pred_fallthru
        _
      %p326 = scmp.le.s32.totalorder 1, %s21
      %p327 = scmp.lt.s32.totalorder %s21, 3
      %p328 = pnand %p326, %p327
      %p329 = pneg %p328
      // Predicated region
      $region49: #{tpu_custom_call.1} parent=5 // pred_check
        _
      $region50: #{tpu_custom_call.1} parent=5 // pred_check_branch
        %331 = sbr.rel (%p328) target = $region52
      $region51: #{tpu_custom_call.1} parent=5 // pred_region
        %s332 = ssub.s32 %s21, 1
        %s333 = sand.u32 %s60, 1
        %s334 = scalar_lea.sflag [#allocation3], %s333
        %s335 = sand.u32 %s60, 1
        %s336 = smul.addr %s335, 128
        %s337 = scalar_lea.vmem [#allocation2], %s336
        // Predicated region
        $region53: #{tpu_custom_call.1} parent=51 // pred_check
          %p338 = pneg %p73
        $region54: #{tpu_custom_call.1} parent=51 // pred_check_branch
          %340 = sbr.rel (%p338) target = $region56
        $region55: #{tpu_custom_call.1} parent=51 // pred_region
          %342 = dma.done %s334, 2048
        $region56: #{tpu_custom_call.1} parent=51 // pred_fallthru
          _
        // Predicated region
        $region57: #{tpu_custom_call.1} parent=51 // pred_check
          %p343 = pneg %p120
        $region58: #{tpu_custom_call.1} parent=51 // pred_check_branch
          %345 = sbr.rel (%p343) target = $region60
        $region59: #{tpu_custom_call.1} parent=51 // pred_region
          %347 = dma.done [#allocation6], 1024
        $region60: #{tpu_custom_call.1} parent=51 // pred_fallthru
          _
        // Predicated region
        $region61: #{tpu_custom_call.1} parent=51 // pred_check
          %p348 = pneg %p183
        $region62: #{tpu_custom_call.1} parent=51 // pred_check_branch
          %350 = sbr.rel (%p348) target = $region64
        $region63: #{tpu_custom_call.1} parent=51 // pred_region
          %352 = dma.done [#allocation6], 1024
        $region64: #{tpu_custom_call.1} parent=51 // pred_fallthru
          _
        %s353 = smul.u32 16, %s26
        %p354 = scmp.lt.s32.totalorder %s353, 31
        %s355 = scalar_select %p354, %s353, 31
        %s356 = smul.addr %s355, 8
        %s357 = scalar_lea.vmem %s0, %s356
        %p358 = pneg %p47
        %p359 = pneg %p44
        %s360 = sand.u32 %s60, 1
        %s361 = scalar_lea.sflag [#allocation3], %s360
        %s362 = sand.u32 %s60, 1
        %s363 = smul.addr %s362, 128
        %s364 = scalar_lea.vmem [#allocation2], %s363
        %p365 = pneg %p73
        %p366 = pneg %p70
        %s367 = smul.u32 16, %s26
        %p368 = scmp.lt.s32.totalorder %s367, 31
        %s369 = scalar_select %p368, %s367, 31
        %s370 = smul.addr %s369, 8
        %s371 = scalar_lea.vmem %s2, %s370
        %p372 = pneg %p99
        %p373 = pneg %p96
        %p374 = pneg %p120
        %p375 = pneg %p117
        %p376 = pneg %p141
        %p377 = pneg %p138
        %p378 = pneg %p162
        %p379 = pneg %p159
        %p380 = pneg %p183
        %p381 = pneg %p180
        %p382 = pneg %p204
        %p383 = pneg %p201
        %p384 = pneg %p230
        %p385 = pneg %p227
        %s386 = sand.u32 %s217, 1
        %s387 = scalar_lea.sflag [#allocation4], %s386
        %s388 = sand.u32 %s217, 1
        %s389 = smul.addr %s388, 128
        %s390 = scalar_lea.vmem [#allocation8], %s389
        %s391 = smul.u32 16, %s26
        %p392 = scmp.lt.s32.totalorder %s391, 31
        %s393 = scalar_select %p392, %s391, 31
        %s394 = smul.addr %s393, 8
        %s395 = scalar_lea.vmem %s0, %s394
        %s396 = smul.u32 16, %s26
        %s397 = smul.u32 16, %s26
        %s398 = smul.u32 16, %s26
        %p399 = scmp.lt.s32.totalorder %s398, 31
        %s400 = scalar_select %p399, %s398, 31
        %s401 = smul.addr %s400, 8
        %s402 = scalar_lea.vmem %s2, %s401
        %s403 = smul.u32 16, %s26
        %s404 = smul.u32 16, %s26
        %v405 = vld [vmem:[%s395] sm:$0xff]
        %v406 = vld [vmem:[%s395 + $0x8] sm:$0xff]
        %v407 = vld [vmem:[%s395 + $0x10] sm:$0xff]
        %v408 = vld [vmem:[%s395 + $0x18] sm:$0xff]
        %v409 = vld [vmem:[%s395 + $0x20] sm:$0xff]
        %v410 = vld [vmem:[%s395 + $0x28] sm:$0xff]
        %v411 = vld [vmem:[%s395 + $0x30] sm:$0xff]
        %v412 = vld [vmem:[%s395 + $0x38] sm:$0xff]
        %v413 = vld [vmem:[%s395 + $0x40] sm:$0xff]
        %v414 = vld [vmem:[%s395 + $0x48] sm:$0xff]
        %v415 = vld [vmem:[%s395 + $0x50] sm:$0xff]
        %v416 = vld [vmem:[%s395 + $0x58] sm:$0xff]
        %v417 = vld [vmem:[%s395 + $0x60] sm:$0xff]
        %v418 = vld [vmem:[%s395 + $0x68] sm:$0xff]
        %v419 = vld [vmem:[%s395 + $0x70] sm:$0xff]
        %v420 = vld [vmem:[%s395 + $0x78] sm:$0xff]
        %v421 = vld [vmem:[%s337] sm:$0xff]
        %v422 = vld [vmem:[%s337 + $0x8] sm:$0xff]
        %v423 = vld [vmem:[%s337 + $0x10] sm:$0xff]
        %v424 = vld [vmem:[%s337 + $0x18] sm:$0xff]
        %v425 = vld [vmem:[%s337 + $0x20] sm:$0xff]
        %v426 = vld [vmem:[%s337 + $0x28] sm:$0xff]
        %v427 = vld [vmem:[%s337 + $0x30] sm:$0xff]
        %v428 = vld [vmem:[%s337 + $0x38] sm:$0xff]
        %v429 = vld [vmem:[%s337 + $0x40] sm:$0xff]
        %v430 = vld [vmem:[%s337 + $0x48] sm:$0xff]
        %v431 = vld [vmem:[%s337 + $0x50] sm:$0xff]
        %v432 = vld [vmem:[%s337 + $0x58] sm:$0xff]
        %v433 = vld [vmem:[%s337 + $0x60] sm:$0xff]
        %v434 = vld [vmem:[%s337 + $0x68] sm:$0xff]
        %v435 = vld [vmem:[%s337 + $0x70] sm:$0xff]
        %v436 = vld [vmem:[%s337 + $0x78] sm:$0xff]
        %v437 = vld [vmem:[%s402] sm:$0xff]
        %v438 = vld [vmem:[%s402 + $0x8] sm:$0xff]
        %v439 = vld [vmem:[%s402 + $0x10] sm:$0xff]
        %v440 = vld [vmem:[%s402 + $0x18] sm:$0xff]
        %v441 = vld [vmem:[%s402 + $0x20] sm:$0xff]
        %v442 = vld [vmem:[%s402 + $0x28] sm:$0xff]
        %v443 = vld [vmem:[%s402 + $0x30] sm:$0xff]
        %v444 = vld [vmem:[%s402 + $0x38] sm:$0xff]
        %v445 = vld [vmem:[%s402 + $0x40] sm:$0xff]
        %v446 = vld [vmem:[%s402 + $0x48] sm:$0xff]
        %v447 = vld [vmem:[%s402 + $0x50] sm:$0xff]
        %v448 = vld [vmem:[%s402 + $0x58] sm:$0xff]
        %v449 = vld [vmem:[%s402 + $0x60] sm:$0xff]
        %v450 = vld [vmem:[%s402 + $0x68] sm:$0xff]
        %v451 = vld [vmem:[%s402 + $0x70] sm:$0xff]
        %v452 = vld [vmem:[%s402 + $0x78] sm:$0xff]
        %454 = vset.pattern.permute.xlu0 0
        %455 = vperm.xlu0 %454, %v437
        %v456 = vpop.permute.xlu0 %455
        %459 = vset.pattern.permute.xlu0 0
        %460 = vperm.xlu0 %459, %v438
        %v461 = vpop.permute.xlu0 %460
        %464 = vset.pattern.permute.xlu0 0
        %465 = vperm.xlu0 %464, %v439
        %v466 = vpop.permute.xlu0 %465
        %469 = vset.pattern.permute.xlu0 0
        %470 = vperm.xlu0 %469, %v440
        %v471 = vpop.permute.xlu0 %470
        %474 = vset.pattern.permute.xlu0 0
        %475 = vperm.xlu0 %474, %v441
        %v476 = vpop.permute.xlu0 %475
        %479 = vset.pattern.permute.xlu0 0
        %480 = vperm.xlu0 %479, %v442
        %v481 = vpop.permute.xlu0 %480
        %484 = vset.pattern.permute.xlu0 0
        %485 = vperm.xlu0 %484, %v443
        %v486 = vpop.permute.xlu0 %485
        %489 = vset.pattern.permute.xlu0 0
        %490 = vperm.xlu0 %489, %v444
        %v491 = vpop.permute.xlu0 %490
        %494 = vset.pattern.permute.xlu0 0
        %495 = vperm.xlu0 %494, %v445
        %v496 = vpop.permute.xlu0 %495
        %499 = vset.pattern.permute.xlu0 0
        %500 = vperm.xlu0 %499, %v446
        %v501 = vpop.permute.xlu0 %500
        %504 = vset.pattern.permute.xlu0 0
        %505 = vperm.xlu0 %504, %v447
        %v506 = vpop.permute.xlu0 %505
        %509 = vset.pattern.permute.xlu0 0
        %510 = vperm.xlu0 %509, %v448
        %v511 = vpop.permute.xlu0 %510
        %514 = vset.pattern.permute.xlu0 0
        %515 = vperm.xlu0 %514, %v449
        %v516 = vpop.permute.xlu0 %515
        %519 = vset.pattern.permute.xlu0 0
        %520 = vperm.xlu0 %519, %v450
        %v521 = vpop.permute.xlu0 %520
        %524 = vset.pattern.permute.xlu0 0
        %525 = vperm.xlu0 %524, %v451
        %v526 = vpop.permute.xlu0 %525
        %529 = vset.pattern.permute.xlu0 0
        %530 = vperm.xlu0 %529, %v452
        %v531 = vpop.permute.xlu0 %530
        %v533 = vmul.f32 %v456, %v421
        %v534 = vmul.f32 %v461, %v422
        %v535 = vmul.f32 %v466, %v423
        %v536 = vmul.f32 %v471, %v424
        %v537 = vmul.f32 %v476, %v425
        %v538 = vmul.f32 %v481, %v426
        %v539 = vmul.f32 %v486, %v427
        %v540 = vmul.f32 %v491, %v428
        %v541 = vmul.f32 %v496, %v429
        %v542 = vmul.f32 %v501, %v430
        %v543 = vmul.f32 %v506, %v431
        %v544 = vmul.f32 %v511, %v432
        %v545 = vmul.f32 %v516, %v433
        %v546 = vmul.f32 %v521, %v434
        %v547 = vmul.f32 %v526, %v435
        %v548 = vmul.f32 %v531, %v436
        %v549 = vadd.f32 %v405, %v533
        %v550 = vadd.f32 %v406, %v534
        %v551 = vadd.f32 %v407, %v535
        %v552 = vadd.f32 %v408, %v536
        %v553 = vadd.f32 %v409, %v537
        %v554 = vadd.f32 %v410, %v538
        %v555 = vadd.f32 %v411, %v539
        %v556 = vadd.f32 %v412, %v540
        %v557 = vadd.f32 %v413, %v541
        %v558 = vadd.f32 %v414, %v542
        %v559 = vadd.f32 %v415, %v543
        %v560 = vadd.f32 %v416, %v544
        %v561 = vadd.f32 %v417, %v545
        %v562 = vadd.f32 %v418, %v546
        %v563 = vadd.f32 %v419, %v547
        %v564 = vadd.f32 %v420, %v548
        %v565 = vmul.f32 %v437, %v437
        %v566 = vmul.f32 %v438, %v438
        %v567 = vmul.f32 %v439, %v439
        %v568 = vmul.f32 %v440, %v440
        %v569 = vmul.f32 %v441, %v441
        %v570 = vmul.f32 %v442, %v442
        %v571 = vmul.f32 %v443, %v443
        %v572 = vmul.f32 %v444, %v444
        %v573 = vmul.f32 %v445, %v445
        %v574 = vmul.f32 %v446, %v446
        %v575 = vmul.f32 %v447, %v447
        %v576 = vmul.f32 %v448, %v448
        %v577 = vmul.f32 %v449, %v449
        %v578 = vmul.f32 %v450, %v450
        %v579 = vmul.f32 %v451, %v451
        %v580 = vmul.f32 %v452, %v452
        %v581 = vadd.f32 %v565, 0.25
        %v582 = vadd.f32 %v566, 0.25
        %v583 = vadd.f32 %v567, 0.25
        %v584 = vadd.f32 %v568, 0.25
        %v585 = vadd.f32 %v569, 0.25
        %v586 = vadd.f32 %v570, 0.25
        %v587 = vadd.f32 %v571, 0.25
        %v588 = vadd.f32 %v572, 0.25
        %v589 = vadd.f32 %v573, 0.25
        %v590 = vadd.f32 %v574, 0.25
        %v591 = vadd.f32 %v575, 0.25
        %v592 = vadd.f32 %v576, 0.25
        %v593 = vadd.f32 %v577, 0.25
        %v594 = vadd.f32 %v578, 0.25
        %v595 = vadd.f32 %v579, 0.25
        %v596 = vadd.f32 %v580, 0.25
        %v597 = vrsqrt.pop %v581
        %v598 = vmul.f32 %v597, %v581
        %v599 = vmul.f32 %v598, %v597
        %v600 = vmul.f32 0.5, %v599
        %v601 = vsub.f32 1.5, %v600
        %v602 = vmul.f32 %v597, %v601
        %vm603 = vweird.f32 %v581
        %vm604 = vweird.f32 %v597
        %vm605 = vmor %vm603, %vm604
        %v606 = vsel %vm605, %v597, %v602
        %v607 = vrsqrt.pop %v582
        %v608 = vmul.f32 %v607, %v582
        %v609 = vmul.f32 %v608, %v607
        %v610 = vmul.f32 0.5, %v609
        %v611 = vsub.f32 1.5, %v610
        %v612 = vmul.f32 %v607, %v611
        %vm613 = vweird.f32 %v582
        %vm614 = vweird.f32 %v607
        %vm615 = vmor %vm613, %vm614
        %v616 = vsel %vm615, %v607, %v612
        %v617 = vrsqrt.pop %v583
        %v618 = vmul.f32 %v617, %v583
        %v619 = vmul.f32 %v618, %v617
        %v620 = vmul.f32 0.5, %v619
        %v621 = vsub.f32 1.5, %v620
        %v622 = vmul.f32 %v617, %v621
        %vm623 = vweird.f32 %v583
        %vm624 = vweird.f32 %v617
        %vm625 = vmor %vm623, %vm624
        %v626 = vsel %vm625, %v617, %v622
        %v627 = vrsqrt.pop %v584
        %v628 = vmul.f32 %v627, %v584
        %v629 = vmul.f32 %v628, %v627
        %v630 = vmul.f32 0.5, %v629
        %v631 = vsub.f32 1.5, %v630
        %v632 = vmul.f32 %v627, %v631
        %vm633 = vweird.f32 %v584
        %vm634 = vweird.f32 %v627
        %vm635 = vmor %vm633, %vm634
        %v636 = vsel %vm635, %v627, %v632
        %v637 = vrsqrt.pop %v585
        %v638 = vmul.f32 %v637, %v585
        %v639 = vmul.f32 %v638, %v637
        %v640 = vmul.f32 0.5, %v639
        %v641 = vsub.f32 1.5, %v640
        %v642 = vmul.f32 %v637, %v641
        %vm643 = vweird.f32 %v585
        %vm644 = vweird.f32 %v637
        %vm645 = vmor %vm643, %vm644
        %v646 = vsel %vm645, %v637, %v642
        %v647 = vrsqrt.pop %v586
        %v648 = vmul.f32 %v647, %v586
        %v649 = vmul.f32 %v648, %v647
        %v650 = vmul.f32 0.5, %v649
        %v651 = vsub.f32 1.5, %v650
        %v652 = vmul.f32 %v647, %v651
        %vm653 = vweird.f32 %v586
        %vm654 = vweird.f32 %v647
        %vm655 = vmor %vm653, %vm654
        %v656 = vsel %vm655, %v647, %v652
        %v657 = vrsqrt.pop %v587
        %v658 = vmul.f32 %v657, %v587
        %v659 = vmul.f32 %v658, %v657
        %v660 = vmul.f32 0.5, %v659
        %v661 = vsub.f32 1.5, %v660
        %v662 = vmul.f32 %v657, %v661
        %vm663 = vweird.f32 %v587
        %vm664 = vweird.f32 %v657
        %vm665 = vmor %vm663, %vm664
        %v666 = vsel %vm665, %v657, %v662
        %v667 = vrsqrt.pop %v588
        %v668 = vmul.f32 %v667, %v588
        %v669 = vmul.f32 %v668, %v667
        %v670 = vmul.f32 0.5, %v669
        %v671 = vsub.f32 1.5, %v670
        %v672 = vmul.f32 %v667, %v671
        %vm673 = vweird.f32 %v588
        %vm674 = vweird.f32 %v667
        %vm675 = vmor %vm673, %vm674
        %v676 = vsel %vm675, %v667, %v672
        %v677 = vrsqrt.pop %v589
        %v678 = vmul.f32 %v677, %v589
        %v679 = vmul.f32 %v678, %v677
        %v680 = vmul.f32 0.5, %v679
        %v681 = vsub.f32 1.5, %v680
        %v682 = vmul.f32 %v677, %v681
        %vm683 = vweird.f32 %v589
        %vm684 = vweird.f32 %v677
        %vm685 = vmor %vm683, %vm684
        %v686 = vsel %vm685, %v677, %v682
        %v687 = vrsqrt.pop %v590
        %v688 = vmul.f32 %v687, %v590
        %v689 = vmul.f32 %v688, %v687
        %v690 = vmul.f32 0.5, %v689
        %v691 = vsub.f32 1.5, %v690
        %v692 = vmul.f32 %v687, %v691
        %vm693 = vweird.f32 %v590
        %vm694 = vweird.f32 %v687
        %vm695 = vmor %vm693, %vm694
        %v696 = vsel %vm695, %v687, %v692
        %v697 = vrsqrt.pop %v591
        %v698 = vmul.f32 %v697, %v591
        %v699 = vmul.f32 %v698, %v697
        %v700 = vmul.f32 0.5, %v699
        %v701 = vsub.f32 1.5, %v700
        %v702 = vmul.f32 %v697, %v701
        %vm703 = vweird.f32 %v591
        %vm704 = vweird.f32 %v697
        %vm705 = vmor %vm703, %vm704
        %v706 = vsel %vm705, %v697, %v702
        %v707 = vrsqrt.pop %v592
        %v708 = vmul.f32 %v707, %v592
        %v709 = vmul.f32 %v708, %v707
        %v710 = vmul.f32 0.5, %v709
        %v711 = vsub.f32 1.5, %v710
        %v712 = vmul.f32 %v707, %v711
        %vm713 = vweird.f32 %v592
        %vm714 = vweird.f32 %v707
        %vm715 = vmor %vm713, %vm714
        %v716 = vsel %vm715, %v707, %v712
        %v717 = vrsqrt.pop %v593
        %v718 = vmul.f32 %v717, %v593
        %v719 = vmul.f32 %v718, %v717
        %v720 = vmul.f32 0.5, %v719
        %v721 = vsub.f32 1.5, %v720
        %v722 = vmul.f32 %v717, %v721
        %vm723 = vweird.f32 %v593
        %vm724 = vweird.f32 %v717
        %vm725 = vmor %vm723, %vm724
        %v726 = vsel %vm725, %v717, %v722
        %v727 = vrsqrt.pop %v594
        %v728 = vmul.f32 %v727, %v594
        %v729 = vmul.f32 %v728, %v727
        %v730 = vmul.f32 0.5, %v729
        %v731 = vsub.f32 1.5, %v730
        %v732 = vmul.f32 %v727, %v731
        %vm733 = vweird.f32 %v594
        %vm734 = vweird.f32 %v727
        %vm735 = vmor %vm733, %vm734
        %v736 = vsel %vm735, %v727, %v732
        %v737 = vrsqrt.pop %v595
        %v738 = vmul.f32 %v737, %v595
        %v739 = vmul.f32 %v738, %v737
        %v740 = vmul.f32 0.5, %v739
        %v741 = vsub.f32 1.5, %v740
        %v742 = vmul.f32 %v737, %v741
        %vm743 = vweird.f32 %v595
        %vm744 = vweird.f32 %v737
        %vm745 = vmor %vm743, %vm744
        %v746 = vsel %vm745, %v737, %v742
        %v747 = vrsqrt.pop %v596
        %v748 = vmul.f32 %v747, %v596
        %v749 = vmul.f32 %v748, %v747
        %v750 = vmul.f32 0.5, %v749
        %v751 = vsub.f32 1.5, %v750
        %v752 = vmul.f32 %v747, %v751
        %vm753 = vweird.f32 %v596
        %vm754 = vweird.f32 %v747
        %vm755 = vmor %vm753, %vm754
        %v756 = vsel %vm755, %v747, %v752
        %v757 = vmul.f32 %v606, 0.25
        %v758 = vmul.f32 %v616, 0.25
        %v759 = vmul.f32 %v626, 0.25
        %v760 = vmul.f32 %v636, 0.25
        %v761 = vmul.f32 %v646, 0.25
        %v762 = vmul.f32 %v656, 0.25
        %v763 = vmul.f32 %v666, 0.25
        %v764 = vmul.f32 %v676, 0.25
        %v765 = vmul.f32 %v686, 0.25
        %v766 = vmul.f32 %v696, 0.25
        %v767 = vmul.f32 %v706, 0.25
        %v768 = vmul.f32 %v716, 0.25
        %v769 = vmul.f32 %v726, 0.25
        %v770 = vmul.f32 %v736, 0.25
        %v771 = vmul.f32 %v746, 0.25
        %v772 = vmul.f32 %v756, 0.25
        %v773 = vmul.f32 %v757, %v606
        %v774 = vmul.f32 %v758, %v616
        %v775 = vmul.f32 %v759, %v626
        %v776 = vmul.f32 %v760, %v636
        %v777 = vmul.f32 %v761, %v646
        %v778 = vmul.f32 %v762, %v656
        %v779 = vmul.f32 %v763, %v666
        %v780 = vmul.f32 %v764, %v676
        %v781 = vmul.f32 %v765, %v686
        %v782 = vmul.f32 %v766, %v696
        %v783 = vmul.f32 %v767, %v706
        %v784 = vmul.f32 %v768, %v716
        %v785 = vmul.f32 %v769, %v726
        %v786 = vmul.f32 %v770, %v736
        %v787 = vmul.f32 %v771, %v746
        %v788 = vmul.f32 %v772, %v756
        %v789 = vmul.f32 %v437, 0.5
        %v790 = vmul.f32 %v438, 0.5
        %v791 = vmul.f32 %v439, 0.5
        %v792 = vmul.f32 %v440, 0.5
        %v793 = vmul.f32 %v441, 0.5
        %v794 = vmul.f32 %v442, 0.5
        %v795 = vmul.f32 %v443, 0.5
        %v796 = vmul.f32 %v444, 0.5
        %v797 = vmul.f32 %v445, 0.5
        %v798 = vmul.f32 %v446, 0.5
        %v799 = vmul.f32 %v447, 0.5
        %v800 = vmul.f32 %v448, 0.5
        %v801 = vmul.f32 %v449, 0.5
        %v802 = vmul.f32 %v450, 0.5
        %v803 = vmul.f32 %v451, 0.5
        %v804 = vmul.f32 %v452, 0.5
        %v805 = vmul.f32 %v789, %v606
        %v806 = vmul.f32 %v790, %v616
        %v807 = vmul.f32 %v791, %v626
        %v808 = vmul.f32 %v792, %v636
        %v809 = vmul.f32 %v793, %v646
        %v810 = vmul.f32 %v794, %v656
        %v811 = vmul.f32 %v795, %v666
        %v812 = vmul.f32 %v796, %v676
        %v813 = vmul.f32 %v797, %v686
        %v814 = vmul.f32 %v798, %v696
        %v815 = vmul.f32 %v799, %v706
        %v816 = vmul.f32 %v800, %v716
        %v817 = vmul.f32 %v801, %v726
        %v818 = vmul.f32 %v802, %v736
        %v819 = vmul.f32 %v803, %v746
        %v820 = vmul.f32 %v804, %v756
        %v821 = vlog2.pop %v437
        %v822 = vmul.f32 %v821, 0.6931472
        %v823 = vlog2.pop %v438
        %v824 = vmul.f32 %v823, 0.6931472
        %v825 = vlog2.pop %v439
        %v826 = vmul.f32 %v825, 0.6931472
        %v827 = vlog2.pop %v440
        %v828 = vmul.f32 %v827, 0.6931472
        %v829 = vlog2.pop %v441
        %v830 = vmul.f32 %v829, 0.6931472
        %v831 = vlog2.pop %v442
        %v832 = vmul.f32 %v831, 0.6931472
        %v833 = vlog2.pop %v443
        %v834 = vmul.f32 %v833, 0.6931472
        %v835 = vlog2.pop %v444
        %v836 = vmul.f32 %v835, 0.6931472
        %v837 = vlog2.pop %v445
        %v838 = vmul.f32 %v837, 0.6931472
        %v839 = vlog2.pop %v446
        %v840 = vmul.f32 %v839, 0.6931472
        %v841 = vlog2.pop %v447
        %v842 = vmul.f32 %v841, 0.6931472
        %v843 = vlog2.pop %v448
        %v844 = vmul.f32 %v843, 0.6931472
        %v845 = vlog2.pop %v449
        %v846 = vmul.f32 %v845, 0.6931472
        %v847 = vlog2.pop %v450
        %v848 = vmul.f32 %v847, 0.6931472
        %v849 = vlog2.pop %v451
        %v850 = vmul.f32 %v849, 0.6931472
        %v851 = vlog2.pop %v452
        %v852 = vmul.f32 %v851, 0.6931472
        %v853 = vmul.f32 %v822, 0.25
        %v854 = vmul.f32 %v824, 0.25
        %v855 = vmul.f32 %v826, 0.25
        %v856 = vmul.f32 %v828, 0.25
        %v857 = vmul.f32 %v830, 0.25
        %v858 = vmul.f32 %v832, 0.25
        %v859 = vmul.f32 %v834, 0.25
        %v860 = vmul.f32 %v836, 0.25
        %v861 = vmul.f32 %v838, 0.25
        %v862 = vmul.f32 %v840, 0.25
        %v863 = vmul.f32 %v842, 0.25
        %v864 = vmul.f32 %v844, 0.25
        %v865 = vmul.f32 %v846, 0.25
        %v866 = vmul.f32 %v848, 0.25
        %v867 = vmul.f32 %v850, 0.25
        %v868 = vmul.f32 %v852, 0.25
        %870 = vset.pattern.permute.xlu0 1
        %871 = vperm.xlu0 %870, %v606
        %v872 = vpop.permute.xlu0 %871
        %875 = vset.pattern.permute.xlu0 1
        %876 = vperm.xlu0 %875, %v616
        %v877 = vpop.permute.xlu0 %876
        %880 = vset.pattern.permute.xlu0 1
        %881 = vperm.xlu0 %880, %v626
        %v882 = vpop.permute.xlu0 %881
        %885 = vset.pattern.permute.xlu0 1
        %886 = vperm.xlu0 %885, %v636
        %v887 = vpop.permute.xlu0 %886
        %890 = vset.pattern.permute.xlu0 1
        %891 = vperm.xlu0 %890, %v646
        %v892 = vpop.permute.xlu0 %891
        %895 = vset.pattern.permute.xlu0 1
        %896 = vperm.xlu0 %895, %v656
        %v897 = vpop.permute.xlu0 %896
        %900 = vset.pattern.permute.xlu0 1
        %901 = vperm.xlu0 %900, %v666
        %v902 = vpop.permute.xlu0 %901
        %905 = vset.pattern.permute.xlu0 1
        %906 = vperm.xlu0 %905, %v676
        %v907 = vpop.permute.xlu0 %906
        %910 = vset.pattern.permute.xlu0 1
        %911 = vperm.xlu0 %910, %v686
        %v912 = vpop.permute.xlu0 %911
        %915 = vset.pattern.permute.xlu0 1
        %916 = vperm.xlu0 %915, %v696
        %v917 = vpop.permute.xlu0 %916
        %920 = vset.pattern.permute.xlu0 1
        %921 = vperm.xlu0 %920, %v706
        %v922 = vpop.permute.xlu0 %921
        %925 = vset.pattern.permute.xlu0 1
        %926 = vperm.xlu0 %925, %v716
        %v927 = vpop.permute.xlu0 %926
        %930 = vset.pattern.permute.xlu0 1
        %931 = vperm.xlu0 %930, %v726
        %v932 = vpop.permute.xlu0 %931
        %935 = vset.pattern.permute.xlu0 1
        %936 = vperm.xlu0 %935, %v736
        %v937 = vpop.permute.xlu0 %936
        %940 = vset.pattern.permute.xlu0 1
        %941 = vperm.xlu0 %940, %v746
        %v942 = vpop.permute.xlu0 %941
        %945 = vset.pattern.permute.xlu0 1
        %946 = vperm.xlu0 %945, %v756
        %v947 = vpop.permute.xlu0 %946
        %v949 = vmul.f32 %v872, %v549
        %v950 = vmul.f32 %v877, %v550
        %v951 = vmul.f32 %v882, %v551
        %v952 = vmul.f32 %v887, %v552
        %v953 = vmul.f32 %v892, %v553
        %v954 = vmul.f32 %v897, %v554
        %v955 = vmul.f32 %v902, %v555
        %v956 = vmul.f32 %v907, %v556
        %v957 = vmul.f32 %v912, %v557
        %v958 = vmul.f32 %v917, %v558
        %v959 = vmul.f32 %v922, %v559
        %v960 = vmul.f32 %v927, %v560
        %v961 = vmul.f32 %v932, %v561
        %v962 = vmul.f32 %v937, %v562
        %v963 = vmul.f32 %v942, %v563
        %v964 = vmul.f32 %v947, %v564
        %v965 = vpack.c.bf16 %v950, %v949
        %v966 = vpack.c.bf16 %v952, %v951
        %v967 = vpack.c.bf16 %v954, %v953
        %v968 = vpack.c.bf16 %v956, %v955
        %v969 = vpack.c.bf16 %v958, %v957
        %v970 = vpack.c.bf16 %v960, %v959
        %v971 = vpack.c.bf16 %v962, %v961
        %v972 = vpack.c.bf16 %v964, %v963
        %v973 = vld [vmem:[#allocation5] sm:$0xf]
        %v974 = vld [vmem:[#allocation5 + $0x4] sm:$0xf]
        %v975 = vld [vmem:[#allocation5 + $0x8] sm:$0xf]
        %v976 = vld [vmem:[#allocation5 + $0xc] sm:$0xf]
        %v977 = vld [vmem:[#allocation5 + $0x10] sm:$0xf]
        %v978 = vld [vmem:[#allocation5 + $0x14] sm:$0xf]
        %v979 = vld [vmem:[#allocation5 + $0x18] sm:$0xf]
        %v980 = vld [vmem:[#allocation5 + $0x1c] sm:$0xf]
        %v981 = vld [vmem:[#allocation5 + $0x20] sm:$0xf]
        %v982 = vld [vmem:[#allocation5 + $0x24] sm:$0xf]
        %v983 = vld [vmem:[#allocation5 + $0x28] sm:$0xf]
        %v984 = vld [vmem:[#allocation5 + $0x2c] sm:$0xf]
        %v985 = vld [vmem:[#allocation5 + $0x30] sm:$0xf]
        %v986 = vld [vmem:[#allocation5 + $0x34] sm:$0xf]
        %v987 = vld [vmem:[#allocation5 + $0x38] sm:$0xf]
        %v988 = vld [vmem:[#allocation5 + $0x3c] sm:$0xf]
        %v989 = vld [vmem:[%s4] sm:$0x1]
        %v990 = vld [vmem:[%s5] sm:$0x1]
        %992 = vset.pattern.permute.xlu0 1
        %993 = vperm.xlu0 %992, %v853
        %v994 = vpop.permute.xlu0 %993
        %997 = vset.pattern.permute.xlu0 1
        %998 = vperm.xlu0 %997, %v854
        %v999 = vpop.permute.xlu0 %998
        %1002 = vset.pattern.permute.xlu0 1
        %1003 = vperm.xlu0 %1002, %v855
        %v1004 = vpop.permute.xlu0 %1003
        %1007 = vset.pattern.permute.xlu0 1
        %1008 = vperm.xlu0 %1007, %v856
        %v1009 = vpop.permute.xlu0 %1008
        %1012 = vset.pattern.permute.xlu0 1
        %1013 = vperm.xlu0 %1012, %v857
        %v1014 = vpop.permute.xlu0 %1013
        %1017 = vset.pattern.permute.xlu0 1
        %1018 = vperm.xlu0 %1017, %v858
        %v1019 = vpop.permute.xlu0 %1018
        %1022 = vset.pattern.permute.xlu0 1
        %1023 = vperm.xlu0 %1022, %v859
        %v1024 = vpop.permute.xlu0 %1023
        %1027 = vset.pattern.permute.xlu0 1
        %1028 = vperm.xlu0 %1027, %v860
        %v1029 = vpop.permute.xlu0 %1028
        %1032 = vset.pattern.permute.xlu0 1
        %1033 = vperm.xlu0 %1032, %v861
        %v1034 = vpop.permute.xlu0 %1033
        %1037 = vset.pattern.permute.xlu0 1
        %1038 = vperm.xlu0 %1037, %v862
        %v1039 = vpop.permute.xlu0 %1038
        %1042 = vset.pattern.permute.xlu0 1
        %1043 = vperm.xlu0 %1042, %v863
        %v1044 = vpop.permute.xlu0 %1043
        %1047 = vset.pattern.permute.xlu0 1
        %1048 = vperm.xlu0 %1047, %v864
        %v1049 = vpop.permute.xlu0 %1048
        %1052 = vset.pattern.permute.xlu0 1
        %1053 = vperm.xlu0 %1052, %v865
        %v1054 = vpop.permute.xlu0 %1053
        %1057 = vset.pattern.permute.xlu0 1
        %1058 = vperm.xlu0 %1057, %v866
        %v1059 = vpop.permute.xlu0 %1058
        %1062 = vset.pattern.permute.xlu0 1
        %1063 = vperm.xlu0 %1062, %v867
        %v1064 = vpop.permute.xlu0 %1063
        %1067 = vset.pattern.permute.xlu0 1
        %1068 = vperm.xlu0 %1067, %v868
        %v1069 = vpop.permute.xlu0 %1068
        %v1072 = vperm.slane %v990, 0
        %v1074 = vmul.f32 %v994, %v1072
        %v1075 = vmul.f32 %v999, %v1072
        %v1076 = vmul.f32 %v1004, %v1072
        %v1077 = vmul.f32 %v1009, %v1072
        %v1078 = vmul.f32 %v1014, %v1072
        %v1079 = vmul.f32 %v1019, %v1072
        %v1080 = vmul.f32 %v1024, %v1072
        %v1081 = vmul.f32 %v1029, %v1072
        %v1082 = vmul.f32 %v1034, %v1072
        %v1083 = vmul.f32 %v1039, %v1072
        %v1084 = vmul.f32 %v1044, %v1072
        %v1085 = vmul.f32 %v1049, %v1072
        %v1086 = vmul.f32 %v1054, %v1072
        %v1087 = vmul.f32 %v1059, %v1072
        %v1088 = vmul.f32 %v1064, %v1072
        %v1089 = vmul.f32 %v1069, %v1072
        %v1091 = vperm.slane %v989, 0
        %v1093 = vadd.f32 %v1091, %v1074
        %v1094 = vadd.f32 %v1091, %v1075
        %v1095 = vadd.f32 %v1091, %v1076
        %v1096 = vadd.f32 %v1091, %v1077
        %v1097 = vadd.f32 %v1091, %v1078
        %v1098 = vadd.f32 %v1091, %v1079
        %v1099 = vadd.f32 %v1091, %v1080
        %v1100 = vadd.f32 %v1091, %v1081
        %v1101 = vadd.f32 %v1091, %v1082
        %v1102 = vadd.f32 %v1091, %v1083
        %v1103 = vadd.f32 %v1091, %v1084
        %v1104 = vadd.f32 %v1091, %v1085
        %v1105 = vadd.f32 %v1091, %v1086
        %v1106 = vadd.f32 %v1091, %v1087
        %v1107 = vadd.f32 %v1091, %v1088
        %v1108 = vadd.f32 %v1091, %v1089
        %v1125 = vunpack.c.l.b16 %v973
        %v1126 = vunpack.c.l.b16 %v974
        %v1127 = vunpack.c.l.b16 %v975
        %v1128 = vunpack.c.l.b16 %v976
        %v1129 = vunpack.c.l.b16 %v977
        %v1130 = vunpack.c.l.b16 %v978
        %v1131 = vunpack.c.l.b16 %v979
        %v1132 = vunpack.c.l.b16 %v980
        %v1133 = vunpack.c.l.b16 %v981
        %v1134 = vunpack.c.l.b16 %v982
        %v1135 = vunpack.c.l.b16 %v983
        %v1136 = vunpack.c.l.b16 %v984
        %v1137 = vunpack.c.l.b16 %v985
        %v1138 = vunpack.c.l.b16 %v986
        %v1139 = vunpack.c.l.b16 %v987
        %v1140 = vunpack.c.l.b16 %v988
        %v1141 = vpack.c.b16 %v1126, %v1125
        %v1142 = vpack.c.b16 %v1128, %v1127
        %v1143 = vpack.c.b16 %v1130, %v1129
        %v1144 = vpack.c.b16 %v1132, %v1131
        %v1145 = vpack.c.b16 %v1134, %v1133
        %v1146 = vpack.c.b16 %v1136, %v1135
        %v1147 = vpack.c.b16 %v1138, %v1137
        %v1148 = vpack.c.b16 %v1140, %v1139
        %1157 = vmatpush.bf16.msra.mxu0 %v1148
        %1158 = vmatpush.bf16.msra.mxu0 %v1147
        %1159 = vmatpush.bf16.msra.mxu0 %v1146
        %1160 = vmatpush.bf16.msra.mxu0 %v1145
        %1161 = vmatpush.bf16.msra.mxu0 %v1144
        %1162 = vmatpush.bf16.msra.mxu0 %v1143
        %1163 = vmatpush.bf16.msra.mxu0 %v1142
        %1164 = vmatpush.bf16.msra.mxu0 %v1141
        %1165 = vmatmul.bf16.gmra.mxu0 %v965
        %v1166 = vpop.f32.mrf.mxu0
        %v1167 = vadd.f32 %v1093, %v1166
        %v1168 = vpop.f32.mrf.mxu0
        %v1169 = vadd.f32 %v1094, %v1168
        %1170 = vmatmul.bf16.gmra.mxu0 %v966
        %v1171 = vpop.f32.mrf.mxu0
        %v1172 = vadd.f32 %v1095, %v1171
        %v1173 = vpop.f32.mrf.mxu0
        %v1174 = vadd.f32 %v1096, %v1173
        %1175 = vmatmul.bf16.gmra.mxu0 %v967
        %v1176 = vpop.f32.mrf.mxu0
        %v1177 = vadd.f32 %v1097, %v1176
        %v1178 = vpop.f32.mrf.mxu0
        %v1179 = vadd.f32 %v1098, %v1178
        %1180 = vmatmul.bf16.gmra.mxu0 %v968
        %v1181 = vpop.f32.mrf.mxu0
        %v1182 = vadd.f32 %v1099, %v1181
        %v1183 = vpop.f32.mrf.mxu0
        %v1184 = vadd.f32 %v1100, %v1183
        %1185 = vmatmul.bf16.gmra.mxu0 %v969
        %v1186 = vpop.f32.mrf.mxu0
        %v1187 = vadd.f32 %v1101, %v1186
        %v1188 = vpop.f32.mrf.mxu0
        %v1189 = vadd.f32 %v1102, %v1188
        %1190 = vmatmul.bf16.gmra.mxu0 %v970
        %v1191 = vpop.f32.mrf.mxu0
        %v1192 = vadd.f32 %v1103, %v1191
        %v1193 = vpop.f32.mrf.mxu0
        %v1194 = vadd.f32 %v1104, %v1193
        %1195 = vmatmul.bf16.gmra.mxu0 %v971
        %v1196 = vpop.f32.mrf.mxu0
        %v1197 = vadd.f32 %v1105, %v1196
        %v1198 = vpop.f32.mrf.mxu0
        %v1199 = vadd.f32 %v1106, %v1198
        %1200 = vmatmul.bf16.gmra.mxu0 %v972
        %v1201 = vpop.f32.mrf.mxu0
        %v1202 = vadd.f32 %v1107, %v1201
        %v1203 = vpop.f32.mrf.mxu0
        %v1204 = vadd.f32 %v1108, %v1203
        %1205 = vdwg.mxu0
        %v1206 = vmax.f32 %v1167, 0.0
        %v1207 = vmax.f32 %v1169, 0.0
        %v1208 = vmax.f32 %v1172, 0.0
        %v1209 = vmax.f32 %v1174, 0.0
        %v1210 = vmax.f32 %v1177, 0.0
        %v1211 = vmax.f32 %v1179, 0.0
        %v1212 = vmax.f32 %v1182, 0.0
        %v1213 = vmax.f32 %v1184, 0.0
        %v1214 = vmax.f32 %v1187, 0.0
        %v1215 = vmax.f32 %v1189, 0.0
        %v1216 = vmax.f32 %v1192, 0.0
        %v1217 = vmax.f32 %v1194, 0.0
        %v1218 = vmax.f32 %v1197, 0.0
        %v1219 = vmax.f32 %v1199, 0.0
        %v1220 = vmax.f32 %v1202, 0.0
        %v1221 = vmax.f32 %v1204, 0.0
        %v1222 = vpack.c.bf16 %v1207, %v1206
        %v1223 = vpack.c.bf16 %v1209, %v1208
        %v1224 = vpack.c.bf16 %v1211, %v1210
        %v1225 = vpack.c.bf16 %v1213, %v1212
        %v1226 = vpack.c.bf16 %v1215, %v1214
        %v1227 = vpack.c.bf16 %v1217, %v1216
        %v1228 = vpack.c.bf16 %v1219, %v1218
        %v1229 = vpack.c.bf16 %v1221, %v1220
        %v1230 = vld [vmem:[#allocation7] sm:$0xf]
        %v1231 = vld [vmem:[#allocation7 + $0x4] sm:$0xf]
        %v1232 = vld [vmem:[#allocation7 + $0x8] sm:$0xf]
        %v1233 = vld [vmem:[#allocation7 + $0xc] sm:$0xf]
        %v1234 = vld [vmem:[#allocation7 + $0x10] sm:$0xf]
        %v1235 = vld [vmem:[#allocation7 + $0x14] sm:$0xf]
        %v1236 = vld [vmem:[#allocation7 + $0x18] sm:$0xf]
        %v1237 = vld [vmem:[#allocation7 + $0x1c] sm:$0xf]
        %v1238 = vld [vmem:[#allocation7 + $0x20] sm:$0xf]
        %v1239 = vld [vmem:[#allocation7 + $0x24] sm:$0xf]
        %v1240 = vld [vmem:[#allocation7 + $0x28] sm:$0xf]
        %v1241 = vld [vmem:[#allocation7 + $0x2c] sm:$0xf]
        %v1242 = vld [vmem:[#allocation7 + $0x30] sm:$0xf]
        %v1243 = vld [vmem:[#allocation7 + $0x34] sm:$0xf]
        %v1244 = vld [vmem:[#allocation7 + $0x38] sm:$0xf]
        %v1245 = vld [vmem:[#allocation7 + $0x3c] sm:$0xf]
        %v1246 = vld [vmem:[%s7] sm:$0x1]
        %v1248 = vperm.slane %v1246, 0
        %v1266 = vunpack.c.l.b16 %v1230
        %v1267 = vunpack.c.l.b16 %v1231
        %v1268 = vunpack.c.l.b16 %v1232
        %v1269 = vunpack.c.l.b16 %v1233
        %v1270 = vunpack.c.l.b16 %v1234
        %v1271 = vunpack.c.l.b16 %v1235
        %v1272 = vunpack.c.l.b16 %v1236
        %v1273 = vunpack.c.l.b16 %v1237
        %v1274 = vunpack.c.l.b16 %v1238
        %v1275 = vunpack.c.l.b16 %v1239
        %v1276 = vunpack.c.l.b16 %v1240
        %v1277 = vunpack.c.l.b16 %v1241
        %v1278 = vunpack.c.l.b16 %v1242
        %v1279 = vunpack.c.l.b16 %v1243
        %v1280 = vunpack.c.l.b16 %v1244
        %v1281 = vunpack.c.l.b16 %v1245
        %v1282 = vpack.c.b16 %v1267, %v1266
        %v1283 = vpack.c.b16 %v1269, %v1268
        %v1284 = vpack.c.b16 %v1271, %v1270
        %v1285 = vpack.c.b16 %v1273, %v1272
        %v1286 = vpack.c.b16 %v1275, %v1274
        %v1287 = vpack.c.b16 %v1277, %v1276
        %v1288 = vpack.c.b16 %v1279, %v1278
        %v1289 = vpack.c.b16 %v1281, %v1280
        %1298 = vmatpush.bf16.msra.mxu0 %v1289
        %1299 = vmatpush.bf16.msra.mxu0 %v1288
        %1300 = vmatpush.bf16.msra.mxu0 %v1287
        %1301 = vmatpush.bf16.msra.mxu0 %v1286
        %1302 = vmatpush.bf16.msra.mxu0 %v1285
        %1303 = vmatpush.bf16.msra.mxu0 %v1284
        %1304 = vmatpush.bf16.msra.mxu0 %v1283
        %1305 = vmatpush.bf16.msra.mxu0 %v1282
        %1306 = vmatmul.bf16.gmra.mxu0 %v1222
        %v1307 = vpop.f32.mrf.mxu0
        %v1308 = vadd.f32 %v1248, %v1307
        %v1309 = vpop.f32.mrf.mxu0
        %v1310 = vadd.f32 %v1248, %v1309
        %1311 = vmatmul.bf16.gmra.mxu0 %v1223
        %v1312 = vpop.f32.mrf.mxu0
        %v1313 = vadd.f32 %v1248, %v1312
        %v1314 = vpop.f32.mrf.mxu0
        %v1315 = vadd.f32 %v1248, %v1314
        %1316 = vmatmul.bf16.gmra.mxu0 %v1224
        %v1317 = vpop.f32.mrf.mxu0
        %v1318 = vadd.f32 %v1248, %v1317
        %v1319 = vpop.f32.mrf.mxu0
        %v1320 = vadd.f32 %v1248, %v1319
        %1321 = vmatmul.bf16.gmra.mxu0 %v1225
        %v1322 = vpop.f32.mrf.mxu0
        %v1323 = vadd.f32 %v1248, %v1322
        %v1324 = vpop.f32.mrf.mxu0
        %v1325 = vadd.f32 %v1248, %v1324
        %1326 = vmatmul.bf16.gmra.mxu0 %v1226
        %v1327 = vpop.f32.mrf.mxu0
        %v1328 = vadd.f32 %v1248, %v1327
        %v1329 = vpop.f32.mrf.mxu0
        %v1330 = vadd.f32 %v1248, %v1329
        %1331 = vmatmul.bf16.gmra.mxu0 %v1227
        %v1332 = vpop.f32.mrf.mxu0
        %v1333 = vadd.f32 %v1248, %v1332
        %v1334 = vpop.f32.mrf.mxu0
        %v1335 = vadd.f32 %v1248, %v1334
        %1336 = vmatmul.bf16.gmra.mxu0 %v1228
        %v1337 = vpop.f32.mrf.mxu0
        %v1338 = vadd.f32 %v1248, %v1337
        %v1339 = vpop.f32.mrf.mxu0
        %v1340 = vadd.f32 %v1248, %v1339
        %1341 = vmatmul.bf16.gmra.mxu0 %v1229
        %v1342 = vpop.f32.mrf.mxu0
        %v1343 = vadd.f32 %v1248, %v1342
        %v1344 = vpop.f32.mrf.mxu0
        %v1345 = vadd.f32 %v1248, %v1344
        %1346 = vdwg.mxu0
        %1348 = vset.pattern.permute.xlu0 1
        %1349 = vperm.xlu0 %1348, %v773
        %v1350 = vpop.permute.xlu0 %1349
        %1353 = vset.pattern.permute.xlu0 1
        %1354 = vperm.xlu0 %1353, %v774
        %v1355 = vpop.permute.xlu0 %1354
        %1358 = vset.pattern.permute.xlu0 1
        %1359 = vperm.xlu0 %1358, %v775
        %v1360 = vpop.permute.xlu0 %1359
        %1363 = vset.pattern.permute.xlu0 1
        %1364 = vperm.xlu0 %1363, %v776
        %v1365 = vpop.permute.xlu0 %1364
        %1368 = vset.pattern.permute.xlu0 1
        %1369 = vperm.xlu0 %1368, %v777
        %v1370 = vpop.permute.xlu0 %1369
        %1373 = vset.pattern.permute.xlu0 1
        %1374 = vperm.xlu0 %1373, %v778
        %v1375 = vpop.permute.xlu0 %1374
        %1378 = vset.pattern.permute.xlu0 1
        %1379 = vperm.xlu0 %1378, %v779
        %v1380 = vpop.permute.xlu0 %1379
        %1383 = vset.pattern.permute.xlu0 1
        %1384 = vperm.xlu0 %1383, %v780
        %v1385 = vpop.permute.xlu0 %1384
        %1388 = vset.pattern.permute.xlu0 1
        %1389 = vperm.xlu0 %1388, %v781
        %v1390 = vpop.permute.xlu0 %1389
        %1393 = vset.pattern.permute.xlu0 1
        %1394 = vperm.xlu0 %1393, %v782
        %v1395 = vpop.permute.xlu0 %1394
        %1398 = vset.pattern.permute.xlu0 1
        %1399 = vperm.xlu0 %1398, %v783
        %v1400 = vpop.permute.xlu0 %1399
        %1403 = vset.pattern.permute.xlu0 1
        %1404 = vperm.xlu0 %1403, %v784
        %v1405 = vpop.permute.xlu0 %1404
        %1408 = vset.pattern.permute.xlu0 1
        %1409 = vperm.xlu0 %1408, %v785
        %v1410 = vpop.permute.xlu0 %1409
        %1413 = vset.pattern.permute.xlu0 1
        %1414 = vperm.xlu0 %1413, %v786
        %v1415 = vpop.permute.xlu0 %1414
        %1418 = vset.pattern.permute.xlu0 1
        %1419 = vperm.xlu0 %1418, %v787
        %v1420 = vpop.permute.xlu0 %1419
        %1423 = vset.pattern.permute.xlu0 1
        %1424 = vperm.xlu0 %1423, %v788
        %v1425 = vpop.permute.xlu0 %1424
        %v1427 = vmul.f32 %v1350, %v549
        %v1428 = vmul.f32 %v1355, %v550
        %v1429 = vmul.f32 %v1360, %v551
        %v1430 = vmul.f32 %v1365, %v552
        %v1431 = vmul.f32 %v1370, %v553
        %v1432 = vmul.f32 %v1375, %v554
        %v1433 = vmul.f32 %v1380, %v555
        %v1434 = vmul.f32 %v1385, %v556
        %v1435 = vmul.f32 %v1390, %v557
        %v1436 = vmul.f32 %v1395, %v558
        %v1437 = vmul.f32 %v1400, %v559
        %v1438 = vmul.f32 %v1405, %v560
        %v1439 = vmul.f32 %v1410, %v561
        %v1440 = vmul.f32 %v1415, %v562
        %v1441 = vmul.f32 %v1420, %v563
        %v1442 = vmul.f32 %v1425, %v564
        %1444 = vset.pattern.permute.xlu0 1
        %1445 = vperm.xlu0 %1444, %v805
        %v1446 = vpop.permute.xlu0 %1445
        %1449 = vset.pattern.permute.xlu0 1
        %1450 = vperm.xlu0 %1449, %v806
        %v1451 = vpop.permute.xlu0 %1450
        %1454 = vset.pattern.permute.xlu0 1
        %1455 = vperm.xlu0 %1454, %v807
        %v1456 = vpop.permute.xlu0 %1455
        %1459 = vset.pattern.permute.xlu0 1
        %1460 = vperm.xlu0 %1459, %v808
        %v1461 = vpop.permute.xlu0 %1460
        %1464 = vset.pattern.permute.xlu0 1
        %1465 = vperm.xlu0 %1464, %v809
        %v1466 = vpop.permute.xlu0 %1465
        %1469 = vset.pattern.permute.xlu0 1
        %1470 = vperm.xlu0 %1469, %v810
        %v1471 = vpop.permute.xlu0 %1470
        %1474 = vset.pattern.permute.xlu0 1
        %1475 = vperm.xlu0 %1474, %v811
        %v1476 = vpop.permute.xlu0 %1475
        %1479 = vset.pattern.permute.xlu0 1
        %1480 = vperm.xlu0 %1479, %v812
        %v1481 = vpop.permute.xlu0 %1480
        %1484 = vset.pattern.permute.xlu0 1
        %1485 = vperm.xlu0 %1484, %v813
        %v1486 = vpop.permute.xlu0 %1485
        %1489 = vset.pattern.permute.xlu0 1
        %1490 = vperm.xlu0 %1489, %v814
        %v1491 = vpop.permute.xlu0 %1490
        %1494 = vset.pattern.permute.xlu0 1
        %1495 = vperm.xlu0 %1494, %v815
        %v1496 = vpop.permute.xlu0 %1495
        %1499 = vset.pattern.permute.xlu0 1
        %1500 = vperm.xlu0 %1499, %v816
        %v1501 = vpop.permute.xlu0 %1500
        %1504 = vset.pattern.permute.xlu0 1
        %1505 = vperm.xlu0 %1504, %v817
        %v1506 = vpop.permute.xlu0 %1505
        %1509 = vset.pattern.permute.xlu0 1
        %1510 = vperm.xlu0 %1509, %v818
        %v1511 = vpop.permute.xlu0 %1510
        %1514 = vset.pattern.permute.xlu0 1
        %1515 = vperm.xlu0 %1514, %v819
        %v1516 = vpop.permute.xlu0 %1515
        %1519 = vset.pattern.permute.xlu0 1
        %1520 = vperm.xlu0 %1519, %v820
        %v1521 = vpop.permute.xlu0 %1520
        %v1523 = vmul.f32 %v1446, %v1308
        %v1524 = vmul.f32 %v1451, %v1310
        %v1525 = vmul.f32 %v1456, %v1313
        %v1526 = vmul.f32 %v1461, %v1315
        %v1527 = vmul.f32 %v1466, %v1318
        %v1528 = vmul.f32 %v1471, %v1320
        %v1529 = vmul.f32 %v1476, %v1323
        %v1530 = vmul.f32 %v1481, %v1325
        %v1531 = vmul.f32 %v1486, %v1328
        %v1532 = vmul.f32 %v1491, %v1330
        %v1533 = vmul.f32 %v1496, %v1333
        %v1534 = vmul.f32 %v1501, %v1335
        %v1535 = vmul.f32 %v1506, %v1338
        %v1536 = vmul.f32 %v1511, %v1340
        %v1537 = vmul.f32 %v1516, %v1343
        %v1538 = vmul.f32 %v1521, %v1345
        %v1539 = vadd.f32 %v1427, %v1523
        %v1540 = vadd.f32 %v1428, %v1524
        %v1541 = vadd.f32 %v1429, %v1525
        %v1542 = vadd.f32 %v1430, %v1526
        %v1543 = vadd.f32 %v1431, %v1527
        %v1544 = vadd.f32 %v1432, %v1528
        %v1545 = vadd.f32 %v1433, %v1529
        %v1546 = vadd.f32 %v1434, %v1530
        %v1547 = vadd.f32 %v1435, %v1531
        %v1548 = vadd.f32 %v1436, %v1532
        %v1549 = vadd.f32 %v1437, %v1533
        %v1550 = vadd.f32 %v1438, %v1534
        %v1551 = vadd.f32 %v1439, %v1535
        %v1552 = vadd.f32 %v1440, %v1536
        %v1553 = vadd.f32 %v1441, %v1537
        %v1554 = vadd.f32 %v1442, %v1538
        %1555 = vst [vmem:[%s390] sm:$0xff] %v1539
        %1556 = vst [vmem:[%s390 + $0x8] sm:$0xff] %v1540
        %1557 = vst [vmem:[%s390 + $0x10] sm:$0xff] %v1541
        %1558 = vst [vmem:[%s390 + $0x18] sm:$0xff] %v1542
        %1559 = vst [vmem:[%s390 + $0x20] sm:$0xff] %v1543
        %1560 = vst [vmem:[%s390 + $0x28] sm:$0xff] %v1544
        %1561 = vst [vmem:[%s390 + $0x30] sm:$0xff] %v1545
        %1562 = vst [vmem:[%s390 + $0x38] sm:$0xff] %v1546
        %1563 = vst [vmem:[%s390 + $0x40] sm:$0xff] %v1547
        %1564 = vst [vmem:[%s390 + $0x48] sm:$0xff] %v1548
        %1565 = vst [vmem:[%s390 + $0x50] sm:$0xff] %v1549
        %1566 = vst [vmem:[%s390 + $0x58] sm:$0xff] %v1550
        %1567 = vst [vmem:[%s390 + $0x60] sm:$0xff] %v1551
        %1568 = vst [vmem:[%s390 + $0x68] sm:$0xff] %v1552
        %1569 = vst [vmem:[%s390 + $0x70] sm:$0xff] %v1553
        %1570 = vst [vmem:[%s390 + $0x78] sm:$0xff] %v1554
        %s1571 = sand.u32 %s217, 1
        %s1572 = scalar_lea.sflag [#allocation4], %s1571
        %s1573 = sand.u32 %s217, 1
        %s1574 = smul.addr %s1573, 128
        %s1575 = scalar_lea.vmem [#allocation8], %s1574
        // Predicated region
        $region65: #{tpu_custom_call.1} parent=51 // pred_check
          %p1576 = pneg %p227
        $region66: #{tpu_custom_call.1} parent=51 // pred_check_branch
          %1578 = sbr.rel (%p1576) target = $region68
        $region67: #{tpu_custom_call.1} parent=51 // pred_region
          %s1579 = smul.u32 16, %s26
          %1581 = vsyncadd %s1572, 0
          %s1582 = smul.addr %s1579, 8
          %s1583 = scalar_lea.hbm %s8, %s1582
          %s1584 = sshll.u32 %s1575, 4
          %s1585 = int_to_ptr.vmem [resolvable:$true] %s1584
          %s1586 = sshll.u32 %s1583, 4
          %s1587 = int_to_ptr.hbm [resolvable:$true] %s1586
          %1592 = dma.vmem_to_hbm [thread:$0]  %s1585, 2048, %s1587, %s1572, 128, 128, 8
        $region68: #{tpu_custom_call.1} parent=51 // pred_fallthru
          _
      $region52: #{tpu_custom_call.1} parent=5 // pred_fallthru
        _
      %p1593 = scmp.le.s32.totalorder 2, %s21
      // Predicated region
      $region69: #{tpu_custom_call.1} parent=5 // pred_check
        %p1594 = pneg %p1593
      $region70: #{tpu_custom_call.1} parent=5 // pred_check_branch
        %1596 = sbr.rel (%p1594) target = $region72
      $region71: #{tpu_custom_call.1} parent=5 // pred_region
        %s1597 = ssub.s32 %s21, 2
        // Predicated region
        $region73: #{tpu_custom_call.1} parent=71 // pred_check
          %p1598 = pneg %p233
        $region74: #{tpu_custom_call.1} parent=71 // pred_check_branch
          %1600 = sbr.rel (%p1598) target = $region76
        $region75: #{tpu_custom_call.1} parent=71 // pred_region
          %s1601 = sand.u32 %s218, 1
          %s1602 = scalar_lea.sflag [#allocation4], %s1601
          %s1603 = sand.u32 %s218, 1
          %s1604 = smul.addr %s1603, 128
          %s1605 = scalar_lea.vmem [#allocation8], %s1604
          %1607 = dma.done %s1602, 2048
        $region76: #{tpu_custom_call.1} parent=71 // pred_fallthru
          _
      $region72: #{tpu_custom_call.1} parent=5 // pred_fallthru
        _
    $region6: #{tpu_custom_call.1} parent=1 // loop_footer
      %s25 = sadd.s32 1, %s21
    $region7: #{tpu_custom_call.1} parent=1 // loop_footer_branch
      %20 = sbr.rel target = $region3
    $region8: #{tpu_custom_call.1} parent=1 // loop_exit
      _
    %1608 = vsyncpa [#allocation3], 1
    %s1609 = scalar_lea.sflag [#allocation3], 1
    %1610 = vsyncpa %s1609, 1
    %1611 = vsyncpa [#allocation6], 1
    %1612 = vsyncpa [#allocation4], 1
    %s1613 = scalar_lea.sflag [#allocation4], 1
    %1614 = vsyncpa %s1613, 1

</llo_original>
